<compile_context>
chip_gen: v7x
topology: tpu7x:2x2x1
jax: 0.10.0
libtpu: 0.0.40
codegen_flags: <defaults>
</compile_context>

<pallas_src>
import math

import jax
import jax.numpy as jnp
from jax.experimental import pallas as pl
from jax.experimental.pallas import tpu as pltpu


# -----------------------------------------------------------------------------
# Model config (deterministic stand-in sizes)
# -----------------------------------------------------------------------------
VOCAB = 128            # stand-in text vocab
D_LANG = 64            # stand-in language-model d_model
D_IMG = 48             # stand-in image-model num_features
D_MODEL = 32           # transformer d_model
NUM_CLASSES = 92       # 'mscoco' branch of the classifier
NUM_CLASSES_PAD = 128  # lane-dense padding for the classifier matmul
PATCH = 8              # image patch size
IGNORE_INDEX = -100    # classify stage
NEG_BIG = -1e30        # bias value for padded classifier lanes


# -----------------------------------------------------------------------------
# Fused forward kernel (single pallas_call)
# -----------------------------------------------------------------------------
def _fused_forward_kernel(
    patches_ref,       # (B, P, 3*PATCH*PATCH) f32
    lang_emb_ref,      # (B, Lt, D_LANG)       f32
    text_bias_ref,     # (B, Lt)               f32  additive mask bias for text keys
    tgt_ref,           # (B, 1)                i32
    img_w_ref, img_b_ref,            # (PD, DI), (1, DI)
    img_ffn_w_ref, img_ffn_b_ref,    # (DI, DM), (1, DM)
    lang_ffn_w_ref, lang_ffn_b_ref,  # (DL, DM), (1, DM)
    cls_tok_ref,                     # (1, DM)
    wqkv_ref, bqkv_ref,              # (DM, 3*DM), (1, 3*DM)   fused Q|K|V
    wo_ref, bo_ref,                  # (DM, DM), (1, DM)
    clsw_ref, clsb_ref,              # (DM, C_PAD), (1, C_PAD) lane-padded classifier
    loss_ref, cnt_ref, preds_ref,    # (1,1) f32, (1,1) f32, (1,B) i32
):
    f32 = jnp.float32
    bsz = patches_ref.shape[0]
    d = wo_ref.shape[0]
    n_cls = clsw_ref.shape[1]
    scale = 1.0 / math.sqrt(d)

    # Load all (tiny) weights / per-batch scalars once.
    img_w, img_b = img_w_ref[...], img_b_ref[...]
    img_fw, img_fb = img_ffn_w_ref[...], img_ffn_b_ref[...]
    lang_fw, lang_fb = lang_ffn_w_ref[...], lang_ffn_b_ref[...]
    cls_tok = cls_tok_ref[...]
    wqkv, bqkv = wqkv_ref[...], bqkv_ref[...]
    wo, bo = wo_ref[...], bo_ref[...]
    clsw, clsb = clsw_ref[...], clsb_ref[...]
    text_bias = text_bias_ref[...]
    tgt = tgt_ref[...]

    # CLS-token Q/K/V is batch-independent: compute once (fused QKV matmul).
    qkv_c = jnp.dot(cls_tok, wqkv, preferred_element_type=f32) + bqkv     # (1, 3d)
    q_cls = qkv_c[:, 0:d] * scale                                         # (1, d)

    col = jax.lax.broadcasted_iota(jnp.int32, (1, n_cls), 1)
    col_f = col.astype(f32)
    lane_b = jax.lax.broadcasted_iota(jnp.int32, (1, bsz), 1)

    loss_acc = jnp.zeros((1, 1), f32)
    cnt_acc = jnp.zeros((1, 1), f32)
    preds_acc = jnp.zeros((1, bsz), jnp.int32)

    # Tiny static batch -> fully unrolled (for large B, grid over the batch axis
    # with dimension_semantics=("parallel",) instead).
    for b in range(bsz):
        # --- image patch embed -> image_ffn (chained MXU matmuls) ---
        pe = jnp.dot(patches_ref[b], img_w, preferred_element_type=f32) + img_b
        img_f = jnp.dot(pe, img_fw, preferred_element_type=f32) + img_fb          # (P, d)
        # --- language_ffn ---
        lang_f = jnp.dot(lang_emb_ref[b], lang_fw, preferred_element_type=f32) + lang_fb  # (Lt, d)
        # --- fused QKV for the key/value segments ---
        qkv_i = jnp.dot(img_f, wqkv, preferred_element_type=f32) + bqkv           # (P, 3d)
        qkv_t = jnp.dot(lang_f, wqkv, preferred_element_type=f32) + bqkv          # (Lt, 3d)

        # --- masked self-attention for the CLS query over [cls | image | text].
        # Downstream consumes only sequence_output[:, 0, :], so computing only
        # the token-0 query row gives an identical result.  Online softmax over
        # the three segments avoids assembling one concatenated sequence.
        m_i = jnp.full((1, 1), -jnp.inf, f32)
        l_i = jnp.zeros((1, 1), f32)
        acc = jnp.zeros((1, d), f32)
        segments = (
            (qkv_c[:, d:2 * d], qkv_c[:, 2 * d:3 * d], None),                 # cls key
            (qkv_i[:, d:2 * d], qkv_i[:, 2 * d:3 * d], None),                 # image keys (mask = 1)
            (qkv_t[:, d:2 * d], qkv_t[:, 2 * d:3 * d], text_bias[b:b + 1, :]),  # text keys (padded masked)
        )
        for k_seg, v_seg, bias_seg in segments:
            s = jnp.einsum("qd,kd->qk", q_cls, k_seg, preferred_element_type=f32)  # (1, n)
            if bias_seg is not None:
                s = s + bias_seg
            m_new = jnp.maximum(m_i, jnp.max(s, axis=-1, keepdims=True))
            alpha = jnp.exp(m_i - m_new)
            p = jnp.exp(s - m_new)
            l_i = alpha * l_i + jnp.sum(p, axis=-1, keepdims=True)
            acc = alpha * acc + jnp.dot(p, v_seg, preferred_element_type=f32)
            m_i = m_new
        ctx = acc * pl.reciprocal(l_i, approx=True)                               # (1, d)

        # --- output projection + residual, classifier on CLS token ---
        out_cls = cls_tok + jnp.dot(ctx, wo, preferred_element_type=f32) + bo     # (1, d)
        logits = jnp.dot(out_cls, clsw, preferred_element_type=f32) + clsb        # (1, C_PAD)

        # --- cross entropy (ignore_index=-100) + argmax pred for this sample ---
        tgt_b = tgt[b:b + 1, :]                                                   # (1, 1) i32
        m_row = jnp.max(logits, axis=-1, keepdims=True)
        lse = m_row + jnp.log(jnp.sum(jnp.exp(logits - m_row), axis=-1, keepdims=True))
        onehot = (col == tgt_b).astype(f32)
        tgt_logit = jnp.sum(logits * onehot, axis=-1, keepdims=True)
        valid = (tgt_b != IGNORE_INDEX).astype(f32)                               # (1, 1)
        loss_acc = loss_acc + (lse - tgt_logit) * valid
        cnt_acc = cnt_acc + valid

        # first maximal index (padded lanes sit at -1e30 and are never selected)
        idx_f = jnp.where(logits >= m_row, col_f, jnp.float32(n_cls))
        pred_b = jnp.min(idx_f, axis=-1, keepdims=True).astype(jnp.int32)         # (1, 1)
        preds_acc = preds_acc + pred_b * (lane_b == b).astype(jnp.int32)

    loss_ref[...] = loss_acc
    cnt_ref[...] = cnt_acc
    preds_ref[...] = preds_acc


def _full_spec(shape):
    nd = len(shape)
    return pl.BlockSpec(shape, lambda i, _nd=nd: (0,) * _nd)


# -----------------------------------------------------------------------------
# Params (deterministic)
# -----------------------------------------------------------------------------
def init_params(key):
    ks = jax.random.split(key, 16)

    def lin(kw, kb, din, dout):
        scale = 1.0 / math.sqrt(din)
        return (jax.random.normal(kw, (din, dout), jnp.float32) * scale,
                jax.random.normal(kb, (dout,), jnp.float32) * 0.01)

    p = {}
    # stand-in for pretrained language model: embedding table
    p["lang_embed"] = jax.random.normal(ks[0], (VOCAB, D_LANG), jnp.float32) * 0.02
    # stand-in for pretrained image model: patch-linear embedding
    p["img_embed_w"], p["img_embed_b"] = lin(ks[1], ks[2], 3 * PATCH * PATCH, D_IMG)
    # language_ffn / image_ffn (args.ffn == True)
    p["lang_ffn_w"], p["lang_ffn_b"] = lin(ks[3], ks[4], D_LANG, D_MODEL)
    p["img_ffn_w"], p["img_ffn_b"] = lin(ks[5], ks[6], D_IMG, D_MODEL)
    # EmbClassToken: zeros, exactly like the PyTorch module
    p["cls_token"] = jnp.zeros((1, 1, D_MODEL), jnp.float32)
    # single-attention-block stand-in for the T5EncoderModel transformer
    p["wq"], p["bq"] = lin(ks[7], ks[8], D_MODEL, D_MODEL)
    p["wk"], _ = lin(ks[9], ks[10], D_MODEL, D_MODEL)
    p["wv"], _ = lin(ks[11], ks[12], D_MODEL, D_MODEL)
    p["wo"], p["bo"] = lin(ks[13], ks[14], D_MODEL, D_MODEL)
    # classifier head ('mscoco': 92 classes)
    p["cls_w"], p["cls_b"] = lin(ks[15], ks[8], D_MODEL, NUM_CLASSES)
    return p


# -----------------------------------------------------------------------------
# Forward (classify stage, return_loss=True) — single fused pallas_call
# -----------------------------------------------------------------------------
@jax.jit
def forward(params, images, src_texts, tgt_texts):
    bsz, _, h, w = images.shape

    # src attention mask: ones, zero where token id == 0 (pad)
    src_attention_masks = (src_texts != 0).astype(jnp.float32)               # (B, Lt)

    # --- "language model" stand-in: embedding lookup (glue gather) ---
    # TODO(synk): real model is a frozen pretrained T5 encoder stack.
    language_embeddings = params["lang_embed"][src_texts]                    # (B, Lt, D_LANG)

    # --- patchify (glue); the patch-linear "image model" runs inside the kernel ---
    # TODO(synk): real model is a pretrained ResNet/Swin backbone.
    ph, pw = h // PATCH, w // PATCH
    patches = images.reshape(bsz, 3, ph, PATCH, pw, PATCH)
    patches = patches.transpose(0, 2, 4, 1, 3, 5).reshape(bsz, ph * pw, 3 * PATCH * PATCH)

    # additive attention bias for the text keys (cls / image masks are all ones)
    text_bias = (1.0 - src_attention_masks) * (-1e9)                         # (B, Lt)

    tgt2 = tgt_texts.reshape(bsz, 1).astype(jnp.int32)

    # fused QKV weight (zero biases for K/V folded in) and lane-padded classifier
    wqkv = jnp.concatenate([params["wq"], params["wk"], params["wv"]], axis=1)
    bqkv = jnp.concatenate(
        [params["bq"], jnp.zeros((2 * D_MODEL,), jnp.float32)]).reshape(1, 3 * D_MODEL)
    clsw = jnp.pad(params["cls_w"], ((0, 0), (0, NUM_CLASSES_PAD - NUM_CLASSES)))
    clsb = jnp.concatenate(
        [params["cls_b"],
         jnp.full((NUM_CLASSES_PAD - NUM_CLASSES,), NEG_BIG, jnp.float32)]
    ).reshape(1, NUM_CLASSES_PAD)

    inputs = (
        patches, language_embeddings, text_bias, tgt2,
        params["img_embed_w"], params["img_embed_b"].reshape(1, D_IMG),
        params["img_ffn_w"], params["img_ffn_b"].reshape(1, D_MODEL),
        params["lang_ffn_w"], params["lang_ffn_b"].reshape(1, D_MODEL),
        params["cls_token"].reshape(1, D_MODEL),
        wqkv, bqkv,
        params["wo"], params["bo"].reshape(1, D_MODEL),
        clsw, clsb,
    )

    sum_loss, count, preds = pl.pallas_call(
        _fused_forward_kernel,
        out_shape=(jax.ShapeDtypeStruct((1, 1), jnp.float32),
                   jax.ShapeDtypeStruct((1, 1), jnp.float32),
                   jax.ShapeDtypeStruct((1, bsz), jnp.int32)),
        grid=(1,),
        in_specs=[_full_spec(a.shape) for a in inputs],
        out_specs=(_full_spec((1, 1)), _full_spec((1, 1)), _full_spec((1, bsz))),
        compiler_params=pltpu.CompilerParams(dimension_semantics=("arbitrary",)),
    )(*inputs)

    # mean reduction with ignore_index=-100 (0/0 -> NaN, matching torch CE 'mean')
    loss = sum_loss[0, 0] / count[0, 0]
    preds = preds[0]
    return loss, preds


# -----------------------------------------------------------------------------
# Demo
# -----------------------------------------------------------------------------
if __name__ == "__main__":
    key = jax.random.PRNGKey(0)
    k_params, k_img, k_txt, k_tgt = jax.random.split(key, 4)

    params = init_params(k_params)

    B, L_TEXT = 2, 8
    images = jax.random.normal(k_img, (B, 3, 16, 16), jnp.float32)     # NCHW
    src_texts = jax.random.randint(k_txt, (B, L_TEXT), 1, VOCAB, dtype=jnp.int32)
    src_texts = src_texts.at[0, -1].set(0)                             # one pad token
    tgt_texts = jax.random.randint(k_tgt, (B,), 0, NUM_CLASSES, dtype=jnp.int32)

    loss, preds = forward(params, images, src_texts, tgt_texts)
    jax.block_until_ready((loss, preds))

    assert loss.shape == () and preds.shape == (B,)
    assert jnp.isfinite(loss)
    assert bool(jnp.all((preds >= 0) & (preds < NUM_CLASSES)))
    print("KERNEL_OK")
</pallas_src>

<mosaic_0001>
module attributes {stable_mosaic.version = 11 : i64} {
  func.func @_fused_forward_kernel(%arg0: i32, %arg1: memref<2x4x192xf32, #tpu.memory_space<vmem>>, %arg2: memref<2x8x64xf32, #tpu.memory_space<vmem>>, %arg3: memref<2x8xf32, #tpu.memory_space<vmem>>, %arg4: memref<2x1xi32, #tpu.memory_space<vmem>>, %arg5: memref<192x48xf32, #tpu.memory_space<vmem>>, %arg6: memref<1x48xf32, #tpu.memory_space<vmem>>, %arg7: memref<48x32xf32, #tpu.memory_space<vmem>>, %arg8: memref<1x32xf32, #tpu.memory_space<vmem>>, %arg9: memref<64x32xf32, #tpu.memory_space<vmem>>, %arg10: memref<1x32xf32, #tpu.memory_space<vmem>>, %arg11: memref<1x32xf32, #tpu.memory_space<vmem>>, %arg12: memref<32x96xf32, #tpu.memory_space<vmem>>, %arg13: memref<1x96xf32, #tpu.memory_space<vmem>>, %arg14: memref<32x32xf32, #tpu.memory_space<vmem>>, %arg15: memref<1x32xf32, #tpu.memory_space<vmem>>, %arg16: memref<32x128xf32, #tpu.memory_space<vmem>>, %arg17: memref<1x128xf32, #tpu.memory_space<vmem>>, %arg18: memref<1x1xf32, #tpu.memory_space<vmem>>, %arg19: memref<1x1xf32, #tpu.memory_space<vmem>>, %arg20: memref<1x2xi32, #tpu.memory_space<vmem>>) attributes {dimension_semantics = [#tpu.dimension_semantics<arbitrary>], iteration_bounds = array<i64: 1>, scalar_prefetch = 0 : i64, scratch_operands = 0 : i64, tpu.core_type = #tpu.core_type<tc>, window_params = [{pipeline_mode = #tpu.pipeline_mode<synchronous>, transform_indices = @transform_0, window_bounds = array<i64: 2, 4, 192>}, {pipeline_mode = #tpu.pipeline_mode<synchronous>, transform_indices = @transform_1, window_bounds = array<i64: 2, 8, 64>}, {pipeline_mode = #tpu.pipeline_mode<synchronous>, transform_indices = @transform_2, window_bounds = array<i64: 2, 8>}, {pipeline_mode = #tpu.pipeline_mode<synchronous>, transform_indices = @transform_3, window_bounds = array<i64: 2, 1>}, {pipeline_mode = #tpu.pipeline_mode<synchronous>, transform_indices = @transform_4, window_bounds = array<i64: 192, 48>}, {pipeline_mode = #tpu.pipeline_mode<synchronous>, transform_indices = @transform_5, window_bounds = array<i64: 1, 48>}, {pipeline_mode = #tpu.pipeline_mode<synchronous>, transform_indices = @transform_6, window_bounds = array<i64: 48, 32>}, {pipeline_mode = #tpu.pipeline_mode<synchronous>, transform_indices = @transform_7, window_bounds = array<i64: 1, 32>}, {pipeline_mode = #tpu.pipeline_mode<synchronous>, transform_indices = @transform_8, window_bounds = array<i64: 64, 32>}, {pipeline_mode = #tpu.pipeline_mode<synchronous>, transform_indices = @transform_9, window_bounds = array<i64: 1, 32>}, {pipeline_mode = #tpu.pipeline_mode<synchronous>, transform_indices = @transform_10, window_bounds = array<i64: 1, 32>}, {pipeline_mode = #tpu.pipeline_mode<synchronous>, transform_indices = @transform_11, window_bounds = array<i64: 32, 96>}, {pipeline_mode = #tpu.pipeline_mode<synchronous>, transform_indices = @transform_12, window_bounds = array<i64: 1, 96>}, {pipeline_mode = #tpu.pipeline_mode<synchronous>, transform_indices = @transform_13, window_bounds = array<i64: 32, 32>}, {pipeline_mode = #tpu.pipeline_mode<synchronous>, transform_indices = @transform_14, window_bounds = array<i64: 1, 32>}, {pipeline_mode = #tpu.pipeline_mode<synchronous>, transform_indices = @transform_15, window_bounds = array<i64: 32, 128>}, {pipeline_mode = #tpu.pipeline_mode<synchronous>, transform_indices = @transform_16, window_bounds = array<i64: 1, 128>}, {pipeline_mode = #tpu.pipeline_mode<synchronous>, transform_indices = @transform_17, window_bounds = array<i64: 1, 1>}, {pipeline_mode = #tpu.pipeline_mode<synchronous>, transform_indices = @transform_18, window_bounds = array<i64: 1, 1>}, {pipeline_mode = #tpu.pipeline_mode<synchronous>, transform_indices = @transform_19, window_bounds = array<i64: 1, 2>}]} {
    %c0 = arith.constant 0 : index
    %c0_0 = arith.constant 0 : index
    %0 = vector.load %arg5[%c0, %c0_0] : memref<192x48xf32, #tpu.memory_space<vmem>>, vector<192x48xf32>
    %c0_1 = arith.constant 0 : index
    %c0_2 = arith.constant 0 : index
    %1 = vector.load %arg6[%c0_1, %c0_2] : memref<1x48xf32, #tpu.memory_space<vmem>>, vector<1x48xf32>
    %c0_3 = arith.constant 0 : index
    %c0_4 = arith.constant 0 : index
    %2 = vector.load %arg7[%c0_3, %c0_4] : memref<48x32xf32, #tpu.memory_space<vmem>>, vector<48x32xf32>
    %c0_5 = arith.constant 0 : index
    %c0_6 = arith.constant 0 : index
    %3 = vector.load %arg8[%c0_5, %c0_6] : memref<1x32xf32, #tpu.memory_space<vmem>>, vector<1x32xf32>
    %c0_7 = arith.constant 0 : index
    %c0_8 = arith.constant 0 : index
    %4 = vector.load %arg9[%c0_7, %c0_8] : memref<64x32xf32, #tpu.memory_space<vmem>>, vector<64x32xf32>
    %c0_9 = arith.constant 0 : index
    %c0_10 = arith.constant 0 : index
    %5 = vector.load %arg10[%c0_9, %c0_10] : memref<1x32xf32, #tpu.memory_space<vmem>>, vector<1x32xf32>
    %c0_11 = arith.constant 0 : index
    %c0_12 = arith.constant 0 : index
    %6 = vector.load %arg11[%c0_11, %c0_12] : memref<1x32xf32, #tpu.memory_space<vmem>>, vector<1x32xf32>
    %c0_13 = arith.constant 0 : index
    %c0_14 = arith.constant 0 : index
    %7 = vector.load %arg12[%c0_13, %c0_14] : memref<32x96xf32, #tpu.memory_space<vmem>>, vector<32x96xf32>
    %c0_15 = arith.constant 0 : index
    %c0_16 = arith.constant 0 : index
    %8 = vector.load %arg13[%c0_15, %c0_16] : memref<1x96xf32, #tpu.memory_space<vmem>>, vector<1x96xf32>
    %c0_17 = arith.constant 0 : index
    %c0_18 = arith.constant 0 : index
    %9 = vector.load %arg14[%c0_17, %c0_18] : memref<32x32xf32, #tpu.memory_space<vmem>>, vector<32x32xf32>
    %c0_19 = arith.constant 0 : index
    %c0_20 = arith.constant 0 : index
    %10 = vector.load %arg15[%c0_19, %c0_20] : memref<1x32xf32, #tpu.memory_space<vmem>>, vector<1x32xf32>
    %c0_21 = arith.constant 0 : index
    %c0_22 = arith.constant 0 : index
    %11 = vector.load %arg16[%c0_21, %c0_22] : memref<32x128xf32, #tpu.memory_space<vmem>>, vector<32x128xf32>
    %c0_23 = arith.constant 0 : index
    %c0_24 = arith.constant 0 : index
    %12 = vector.load %arg17[%c0_23, %c0_24] : memref<1x128xf32, #tpu.memory_space<vmem>>, vector<1x128xf32>
    %c0_25 = arith.constant 0 : index
    %c0_26 = arith.constant 0 : index
    %13 = vector.load %arg3[%c0_25, %c0_26] : memref<2x8xf32, #tpu.memory_space<vmem>>, vector<2x8xf32>
    %c0_27 = arith.constant 0 : index
    %c0_28 = arith.constant 0 : index
    %14 = vector.load %arg4[%c0_27, %c0_28] : memref<2x1xi32, #tpu.memory_space<vmem>>, vector<2x1xi32>
    %cst = arith.constant dense<0.000000e+00> : vector<1x96xf32>
    %15 = tpu.matmul %6, %7, %cst {dimension_numbers = #tpu.dot_dimension_numbers<[1], [0], [0], [1], [0, 0, 1, 1], [], []>} : vector<1x32xf32>, vector<32x96xf32>, vector<1x96xf32> -> vector<1x96xf32>
    %16 = arith.addf %15, %8 : vector<1x96xf32>
    %17 = vector.extract_strided_slice %16 {offsets = [0, 0], sizes = [1, 32], strides = [1, 1]} : vector<1x96xf32> to vector<1x32xf32>
    %cst_29 = arith.constant 0.176776692 : f32
    %18 = vector.broadcast %cst_29 : f32 to vector<1x32xf32>
    %19 = arith.mulf %17, %18 : vector<1x32xf32>
    %20 = tpu.iota {dimensions = array<i32: 1>} : vector<1x128xi32>
    %21 = arith.sitofp %20 : vector<1x128xi32> to vector<1x128xf32>
    %22 = tpu.iota {dimensions = array<i32: 1>} : vector<1x2xi32>
    %cst_30 = arith.constant 0.000000e+00 : f32
    %23 = vector.broadcast %cst_30 : f32 to vector<1x1xf32>
    %cst_31 = arith.constant 0.000000e+00 : f32
    %24 = vector.broadcast %cst_31 : f32 to vector<1x1xf32>
    %c0_i32 = arith.constant 0 : i32
    %25 = vector.broadcast %c0_i32 : i32 to vector<1x2xi32>
    %c0_32 = arith.constant 0 : index
    %c0_33 = arith.constant 0 : index
    %c0_34 = arith.constant 0 : index
    %26 = vector.load %arg1[%c0_32, %c0_33, %c0_34] : memref<2x4x192xf32, #tpu.memory_space<vmem>>, vector<1x4x192xf32>
    %27 = vector.shape_cast %26 : vector<1x4x192xf32> to vector<4x192xf32>
    %cst_35 = arith.constant dense<0.000000e+00> : vector<4x48xf32>
    %28 = tpu.matmul %27, %0, %cst_35 {dimension_numbers = #tpu.dot_dimension_numbers<[1], [0], [0], [1], [0, 0, 1, 1], [], []>} : vector<4x192xf32>, vector<192x48xf32>, vector<4x48xf32> -> vector<4x48xf32>
    %29 = vector.broadcast %1 : vector<1x48xf32> to vector<4x48xf32>
    %30 = arith.addf %28, %29 : vector<4x48xf32>
    %cst_36 = arith.constant dense<0.000000e+00> : vector<4x32xf32>
    %31 = tpu.matmul %30, %2, %cst_36 {dimension_numbers = #tpu.dot_dimension_numbers<[1], [0], [0], [1], [0, 0, 1, 1], [], []>} : vector<4x48xf32>, vector<48x32xf32>, vector<4x32xf32> -> vector<4x32xf32>
    %32 = vector.broadcast %3 : vector<1x32xf32> to vector<4x32xf32>
    %33 = arith.addf %31, %32 : vector<4x32xf32>
    %c0_37 = arith.constant 0 : index
    %c0_38 = arith.constant 0 : index
    %c0_39 = arith.constant 0 : index
    %34 = vector.load %arg2[%c0_37, %c0_38, %c0_39] : memref<2x8x64xf32, #tpu.memory_space<vmem>>, vector<1x8x64xf32>
    %35 = vector.shape_cast %34 : vector<1x8x64xf32> to vector<8x64xf32>
    %cst_40 = arith.constant dense<0.000000e+00> : vector<8x32xf32>
    %36 = tpu.matmul %35, %4, %cst_40 {dimension_numbers = #tpu.dot_dimension_numbers<[1], [0], [0], [1], [0, 0, 1, 1], [], []>} : vector<8x64xf32>, vector<64x32xf32>, vector<8x32xf32> -> vector<8x32xf32>
    %37 = vector.broadcast %5 : vector<1x32xf32> to vector<8x32xf32>
    %38 = arith.addf %36, %37 : vector<8x32xf32>
    %cst_41 = arith.constant dense<0.000000e+00> : vector<4x96xf32>
    %39 = tpu.matmul %33, %7, %cst_41 {dimension_numbers = #tpu.dot_dimension_numbers<[1], [0], [0], [1], [0, 0, 1, 1], [], []>} : vector<4x32xf32>, vector<32x96xf32>, vector<4x96xf32> -> vector<4x96xf32>
    %40 = vector.broadcast %8 : vector<1x96xf32> to vector<4x96xf32>
    %41 = arith.addf %39, %40 : vector<4x96xf32>
    %cst_42 = arith.constant dense<0.000000e+00> : vector<8x96xf32>
    %42 = tpu.matmul %38, %7, %cst_42 {dimension_numbers = #tpu.dot_dimension_numbers<[1], [0], [0], [1], [0, 0, 1, 1], [], []>} : vector<8x32xf32>, vector<32x96xf32>, vector<8x96xf32> -> vector<8x96xf32>
    %43 = vector.broadcast %8 : vector<1x96xf32> to vector<8x96xf32>
    %44 = arith.addf %42, %43 : vector<8x96xf32>
    %cst_43 = arith.constant 0xFF800000 : f32
    %45 = vector.broadcast %cst_43 : f32 to vector<1x1xf32>
    %cst_44 = arith.constant 0.000000e+00 : f32
    %46 = vector.broadcast %cst_44 : f32 to vector<1x1xf32>
    %cst_45 = arith.constant 0.000000e+00 : f32
    %47 = vector.broadcast %cst_45 : f32 to vector<1x32xf32>
    %48 = vector.extract_strided_slice %16 {offsets = [0, 32], sizes = [1, 32], strides = [1, 1]} : vector<1x96xf32> to vector<1x32xf32>
    %49 = vector.extract_strided_slice %16 {offsets = [0, 64], sizes = [1, 32], strides = [1, 1]} : vector<1x96xf32> to vector<1x32xf32>
    %50 = vector.extract_strided_slice %41 {offsets = [0, 32], sizes = [4, 32], strides = [1, 1]} : vector<4x96xf32> to vector<4x32xf32>
    %51 = vector.extract_strided_slice %41 {offsets = [0, 64], sizes = [4, 32], strides = [1, 1]} : vector<4x96xf32> to vector<4x32xf32>
    %52 = vector.extract_strided_slice %44 {offsets = [0, 32], sizes = [8, 32], strides = [1, 1]} : vector<8x96xf32> to vector<8x32xf32>
    %53 = vector.extract_strided_slice %44 {offsets = [0, 64], sizes = [8, 32], strides = [1, 1]} : vector<8x96xf32> to vector<8x32xf32>
    %54 = vector.extract_strided_slice %13 {offsets = [0, 0], sizes = [1, 8], strides = [1, 1]} : vector<2x8xf32> to vector<1x8xf32>
    "tpu.trace_start"() <{level = 10 : i32, message = "qd,kd->qk"}> : () -> ()
    %cst_46 = arith.constant dense<0.000000e+00> : vector<1x1xf32>
    %55 = tpu.matmul %19, %48, %cst_46 {dimension_numbers = #tpu.dot_dimension_numbers<[1], [1], [0], [0], [0, 0, 1, 0], [], []>} : vector<1x32xf32>, vector<1x32xf32>, vector<1x1xf32> -> vector<1x1xf32>
    "tpu.trace_stop"() : () -> ()
    %cst_47 = arith.constant dense<0xFF800000> : vector<1xf32>
    %56 = vector.multi_reduction <maximumf>, %55, %cst_47 [1] : vector<1x1xf32> to vector<1xf32>
    %57 = vector.shape_cast %56 : vector<1xf32> to vector<1x1xf32>
    %58 = arith.maximumf %45, %57 : vector<1x1xf32>
    %59 = arith.subf %45, %58 : vector<1x1xf32>
    %60 = math.exp %59 : vector<1x1xf32>
    %61 = arith.subf %55, %58 : vector<1x1xf32>
    %62 = math.exp %61 : vector<1x1xf32>
    %63 = arith.mulf %60, %46 : vector<1x1xf32>
    %cst_48 = arith.constant dense<0.000000e+00> : vector<1xf32>
    %64 = vector.multi_reduction <add>, %62, %cst_48 [1] : vector<1x1xf32> to vector<1xf32>
    %65 = vector.shape_cast %64 : vector<1xf32> to vector<1x1xf32>
    %66 = arith.addf %63, %65 : vector<1x1xf32>
    %67 = vector.broadcast %60 : vector<1x1xf32> to vector<1x32xf32>
    %68 = arith.mulf %67, %47 : vector<1x32xf32>
    %cst_49 = arith.constant dense<0.000000e+00> : vector<1x32xf32>
    %69 = tpu.matmul %62, %49, %cst_49 {dimension_numbers = #tpu.dot_dimension_numbers<[1], [0], [0], [1], [0, 0, 1, 1], [], []>} : vector<1x1xf32>, vector<1x32xf32>, vector<1x32xf32> -> vector<1x32xf32>
    %70 = arith.addf %68, %69 : vector<1x32xf32>
    "tpu.trace_start"() <{level = 10 : i32, message = "qd,kd->qk"}> : () -> ()
    %cst_50 = arith.constant dense<0.000000e+00> : vector<1x4xf32>
    %71 = tpu.matmul %19, %50, %cst_50 {dimension_numbers = #tpu.dot_dimension_numbers<[1], [1], [0], [0], [0, 0, 1, 0], [], []>} : vector<1x32xf32>, vector<4x32xf32>, vector<1x4xf32> -> vector<1x4xf32>
    "tpu.trace_stop"() : () -> ()
    %cst_51 = arith.constant dense<0xFF800000> : vector<1xf32>
    %72 = vector.multi_reduction <maximumf>, %71, %cst_51 [1] : vector<1x4xf32> to vector<1xf32>
    %73 = vector.shape_cast %72 : vector<1xf32> to vector<1x1xf32>
    %74 = arith.maximumf %58, %73 : vector<1x1xf32>
    %75 = arith.subf %58, %74 : vector<1x1xf32>
    %76 = math.exp %75 : vector<1x1xf32>
    %77 = vector.broadcast %74 : vector<1x1xf32> to vector<1x4xf32>
    %78 = arith.subf %71, %77 : vector<1x4xf32>
    %79 = math.exp %78 : vector<1x4xf32>
    %80 = arith.mulf %76, %66 : vector<1x1xf32>
    %cst_52 = arith.constant dense<0.000000e+00> : vector<1xf32>
    %81 = vector.multi_reduction <add>, %79, %cst_52 [1] : vector<1x4xf32> to vector<1xf32>
    %82 = vector.shape_cast %81 : vector<1xf32> to vector<1x1xf32>
    %83 = arith.addf %80, %82 : vector<1x1xf32>
    %84 = vector.broadcast %76 : vector<1x1xf32> to vector<1x32xf32>
    %85 = arith.mulf %84, %70 : vector<1x32xf32>
    %cst_53 = arith.constant dense<0.000000e+00> : vector<1x32xf32>
    %86 = tpu.matmul %79, %51, %cst_53 {dimension_numbers = #tpu.dot_dimension_numbers<[1], [0], [0], [1], [0, 0, 1, 1], [], []>} : vector<1x4xf32>, vector<4x32xf32>, vector<1x32xf32> -> vector<1x32xf32>
    %87 = arith.addf %85, %86 : vector<1x32xf32>
    "tpu.trace_start"() <{level = 10 : i32, message = "qd,kd->qk"}> : () -> ()
    %cst_54 = arith.constant dense<0.000000e+00> : vector<1x8xf32>
    %88 = tpu.matmul %19, %52, %cst_54 {dimension_numbers = #tpu.dot_dimension_numbers<[1], [1], [0], [0], [0, 0, 1, 0], [], []>} : vector<1x32xf32>, vector<8x32xf32>, vector<1x8xf32> -> vector<1x8xf32>
    "tpu.trace_stop"() : () -> ()
    %89 = arith.addf %88, %54 : vector<1x8xf32>
    %cst_55 = arith.constant dense<0xFF800000> : vector<1xf32>
    %90 = vector.multi_reduction <maximumf>, %89, %cst_55 [1] : vector<1x8xf32> to vector<1xf32>
    %91 = vector.shape_cast %90 : vector<1xf32> to vector<1x1xf32>
    %92 = arith.maximumf %74, %91 : vector<1x1xf32>
    %93 = arith.subf %74, %92 : vector<1x1xf32>
    %94 = math.exp %93 : vector<1x1xf32>
    %95 = vector.broadcast %92 : vector<1x1xf32> to vector<1x8xf32>
    %96 = arith.subf %89, %95 : vector<1x8xf32>
    %97 = math.exp %96 : vector<1x8xf32>
    %98 = arith.mulf %94, %83 : vector<1x1xf32>
    %cst_56 = arith.constant dense<0.000000e+00> : vector<1xf32>
    %99 = vector.multi_reduction <add>, %97, %cst_56 [1] : vector<1x8xf32> to vector<1xf32>
    %100 = vector.shape_cast %99 : vector<1xf32> to vector<1x1xf32>
    %101 = arith.addf %98, %100 : vector<1x1xf32>
    %102 = vector.broadcast %94 : vector<1x1xf32> to vector<1x32xf32>
    %103 = arith.mulf %102, %87 : vector<1x32xf32>
    %cst_57 = arith.constant dense<0.000000e+00> : vector<1x32xf32>
    %104 = tpu.matmul %97, %53, %cst_57 {dimension_numbers = #tpu.dot_dimension_numbers<[1], [0], [0], [1], [0, 0, 1, 1], [], []>} : vector<1x8xf32>, vector<8x32xf32>, vector<1x32xf32> -> vector<1x32xf32>
    %105 = arith.addf %103, %104 : vector<1x32xf32>
    %106 = tpu.reciprocal %101 {approx = true} : vector<1x1xf32> -> vector<1x1xf32>
    %107 = vector.broadcast %106 : vector<1x1xf32> to vector<1x32xf32>
    %108 = arith.mulf %105, %107 : vector<1x32xf32>
    %cst_58 = arith.constant dense<0.000000e+00> : vector<1x32xf32>
    %109 = tpu.matmul %108, %9, %cst_58 {dimension_numbers = #tpu.dot_dimension_numbers<[1], [0], [0], [1], [0, 0, 1, 1], [], []>} : vector<1x32xf32>, vector<32x32xf32>, vector<1x32xf32> -> vector<1x32xf32>
    %110 = arith.addf %6, %109 : vector<1x32xf32>
    %111 = arith.addf %110, %10 : vector<1x32xf32>
    %cst_59 = arith.constant dense<0.000000e+00> : vector<1x128xf32>
    %112 = tpu.matmul %111, %11, %cst_59 {dimension_numbers = #tpu.dot_dimension_numbers<[1], [0], [0], [1], [0, 0, 1, 1], [], []>} : vector<1x32xf32>, vector<32x128xf32>, vector<1x128xf32> -> vector<1x128xf32>
    %113 = arith.addf %112, %12 : vector<1x128xf32>
    %114 = vector.extract_strided_slice %14 {offsets = [0, 0], sizes = [1, 1], strides = [1, 1]} : vector<2x1xi32> to vector<1x1xi32>
    %cst_60 = arith.constant dense<0xFF800000> : vector<1xf32>
    %115 = vector.multi_reduction <maximumf>, %113, %cst_60 [1] : vector<1x128xf32> to vector<1xf32>
    %116 = vector.shape_cast %115 : vector<1xf32> to vector<1x1xf32>
    %117 = vector.broadcast %116 : vector<1x1xf32> to vector<1x128xf32>
    %118 = arith.subf %113, %117 : vector<1x128xf32>
    %119 = math.exp %118 : vector<1x128xf32>
    %cst_61 = arith.constant dense<0.000000e+00> : vector<1xf32>
    %120 = vector.multi_reduction <add>, %119, %cst_61 [1] : vector<1x128xf32> to vector<1xf32>
    %121 = vector.shape_cast %120 : vector<1xf32> to vector<1x1xf32>
    %122 = math.log %121 : vector<1x1xf32>
    %123 = arith.addf %116, %122 : vector<1x1xf32>
    %124 = vector.broadcast %114 : vector<1x1xi32> to vector<1x128xi32>
    %125 = arith.cmpi eq, %20, %124 : vector<1x128xi32>
    %126 = arith.extui %125 : vector<1x128xi1> to vector<1x128xi32>
    %127 = arith.sitofp %126 : vector<1x128xi32> to vector<1x128xf32>
    %128 = arith.mulf %113, %127 : vector<1x128xf32>
    %cst_62 = arith.constant dense<0.000000e+00> : vector<1xf32>
    %129 = vector.multi_reduction <add>, %128, %cst_62 [1] : vector<1x128xf32> to vector<1xf32>
    %130 = vector.shape_cast %129 : vector<1xf32> to vector<1x1xf32>
    %c-100_i32 = arith.constant -100 : i32
    %131 = vector.broadcast %c-100_i32 : i32 to vector<1x1xi32>
    %132 = arith.cmpi ne, %114, %131 : vector<1x1xi32>
    %133 = arith.extui %132 : vector<1x1xi1> to vector<1x1xi32>
    %134 = arith.sitofp %133 : vector<1x1xi32> to vector<1x1xf32>
    %135 = arith.subf %123, %130 : vector<1x1xf32>
    %136 = arith.mulf %135, %134 : vector<1x1xf32>
    %137 = arith.addf %23, %136 : vector<1x1xf32>
    %138 = arith.addf %24, %134 : vector<1x1xf32>
    %139 = vector.broadcast %116 : vector<1x1xf32> to vector<1x128xf32>
    %140 = arith.cmpf oge, %113, %139 : vector<1x128xf32>
    %cst_63 = arith.constant 1.280000e+02 : f32
    %141 = vector.broadcast %cst_63 : f32 to vector<1x128xf32>
    %142 = arith.select %140, %21, %141 : vector<1x128xi1>, vector<1x128xf32>
    %cst_64 = arith.constant dense<0x7F800000> : vector<1xf32>
    %143 = vector.multi_reduction <minimumf>, %142, %cst_64 [1] : vector<1x128xf32> to vector<1xf32>
    %144 = vector.shape_cast %143 : vector<1xf32> to vector<1x1xf32>
    %145 = arith.fptosi %144 : vector<1x1xf32> to vector<1x1xi32>
    %c0_i32_65 = arith.constant 0 : i32
    %146 = vector.broadcast %c0_i32_65 : i32 to vector<1x2xi32>
    %147 = arith.cmpi eq, %22, %146 : vector<1x2xi32>
    %148 = arith.extui %147 : vector<1x2xi1> to vector<1x2xi32>
    %149 = vector.broadcast %145 : vector<1x1xi32> to vector<1x2xi32>
    %150 = arith.muli %149, %148 : vector<1x2xi32>
    %151 = arith.addi %25, %150 : vector<1x2xi32>
    %c1 = arith.constant 1 : index
    %c0_66 = arith.constant 0 : index
    %c0_67 = arith.constant 0 : index
    %152 = vector.load %arg1[%c1, %c0_66, %c0_67] : memref<2x4x192xf32, #tpu.memory_space<vmem>>, vector<1x4x192xf32>
    %153 = vector.shape_cast %152 : vector<1x4x192xf32> to vector<4x192xf32>
    %cst_68 = arith.constant dense<0.000000e+00> : vector<4x48xf32>
    %154 = tpu.matmul %153, %0, %cst_68 {dimension_numbers = #tpu.dot_dimension_numbers<[1], [0], [0], [1], [0, 0, 1, 1], [], []>} : vector<4x192xf32>, vector<192x48xf32>, vector<4x48xf32> -> vector<4x48xf32>
    %155 = vector.broadcast %1 : vector<1x48xf32> to vector<4x48xf32>
    %156 = arith.addf %154, %155 : vector<4x48xf32>
    %cst_69 = arith.constant dense<0.000000e+00> : vector<4x32xf32>
    %157 = tpu.matmul %156, %2, %cst_69 {dimension_numbers = #tpu.dot_dimension_numbers<[1], [0], [0], [1], [0, 0, 1, 1], [], []>} : vector<4x48xf32>, vector<48x32xf32>, vector<4x32xf32> -> vector<4x32xf32>
    %158 = vector.broadcast %3 : vector<1x32xf32> to vector<4x32xf32>
    %159 = arith.addf %157, %158 : vector<4x32xf32>
    %c1_70 = arith.constant 1 : index
    %c0_71 = arith.constant 0 : index
    %c0_72 = arith.constant 0 : index
    %160 = vector.load %arg2[%c1_70, %c0_71, %c0_72] : memref<2x8x64xf32, #tpu.memory_space<vmem>>, vector<1x8x64xf32>
    %161 = vector.shape_cast %160 : vector<1x8x64xf32> to vector<8x64xf32>
    %cst_73 = arith.constant dense<0.000000e+00> : vector<8x32xf32>
    %162 = tpu.matmul %161, %4, %cst_73 {dimension_numbers = #tpu.dot_dimension_numbers<[1], [0], [0], [1], [0, 0, 1, 1], [], []>} : vector<8x64xf32>, vector<64x32xf32>, vector<8x32xf32> -> vector<8x32xf32>
    %163 = vector.broadcast %5 : vector<1x32xf32> to vector<8x32xf32>
    %164 = arith.addf %162, %163 : vector<8x32xf32>
    %cst_74 = arith.constant dense<0.000000e+00> : vector<4x96xf32>
    %165 = tpu.matmul %159, %7, %cst_74 {dimension_numbers = #tpu.dot_dimension_numbers<[1], [0], [0], [1], [0, 0, 1, 1], [], []>} : vector<4x32xf32>, vector<32x96xf32>, vector<4x96xf32> -> vector<4x96xf32>
    %166 = vector.broadcast %8 : vector<1x96xf32> to vector<4x96xf32>
    %167 = arith.addf %165, %166 : vector<4x96xf32>
    %cst_75 = arith.constant dense<0.000000e+00> : vector<8x96xf32>
    %168 = tpu.matmul %164, %7, %cst_75 {dimension_numbers = #tpu.dot_dimension_numbers<[1], [0], [0], [1], [0, 0, 1, 1], [], []>} : vector<8x32xf32>, vector<32x96xf32>, vector<8x96xf32> -> vector<8x96xf32>
    %169 = vector.broadcast %8 : vector<1x96xf32> to vector<8x96xf32>
    %170 = arith.addf %168, %169 : vector<8x96xf32>
    %cst_76 = arith.constant 0xFF800000 : f32
    %171 = vector.broadcast %cst_76 : f32 to vector<1x1xf32>
    %cst_77 = arith.constant 0.000000e+00 : f32
    %172 = vector.broadcast %cst_77 : f32 to vector<1x1xf32>
    %cst_78 = arith.constant 0.000000e+00 : f32
    %173 = vector.broadcast %cst_78 : f32 to vector<1x32xf32>
    %174 = vector.extract_strided_slice %16 {offsets = [0, 32], sizes = [1, 32], strides = [1, 1]} : vector<1x96xf32> to vector<1x32xf32>
    %175 = vector.extract_strided_slice %16 {offsets = [0, 64], sizes = [1, 32], strides = [1, 1]} : vector<1x96xf32> to vector<1x32xf32>
    %176 = vector.extract_strided_slice %167 {offsets = [0, 32], sizes = [4, 32], strides = [1, 1]} : vector<4x96xf32> to vector<4x32xf32>
    %177 = vector.extract_strided_slice %167 {offsets = [0, 64], sizes = [4, 32], strides = [1, 1]} : vector<4x96xf32> to vector<4x32xf32>
    %178 = vector.extract_strided_slice %170 {offsets = [0, 32], sizes = [8, 32], strides = [1, 1]} : vector<8x96xf32> to vector<8x32xf32>
    %179 = vector.extract_strided_slice %170 {offsets = [0, 64], sizes = [8, 32], strides = [1, 1]} : vector<8x96xf32> to vector<8x32xf32>
    %180 = vector.extract_strided_slice %13 {offsets = [1, 0], sizes = [1, 8], strides = [1, 1]} : vector<2x8xf32> to vector<1x8xf32>
    "tpu.trace_start"() <{level = 10 : i32, message = "qd,kd->qk"}> : () -> ()
    %cst_79 = arith.constant dense<0.000000e+00> : vector<1x1xf32>
    %181 = tpu.matmul %19, %174, %cst_79 {dimension_numbers = #tpu.dot_dimension_numbers<[1], [1], [0], [0], [0, 0, 1, 0], [], []>} : vector<1x32xf32>, vector<1x32xf32>, vector<1x1xf32> -> vector<1x1xf32>
    "tpu.trace_stop"() : () -> ()
    %cst_80 = arith.constant dense<0xFF800000> : vector<1xf32>
    %182 = vector.multi_reduction <maximumf>, %181, %cst_80 [1] : vector<1x1xf32> to vector<1xf32>
    %183 = vector.shape_cast %182 : vector<1xf32> to vector<1x1xf32>
    %184 = arith.maximumf %171, %183 : vector<1x1xf32>
    %185 = arith.subf %171, %184 : vector<1x1xf32>
    %186 = math.exp %185 : vector<1x1xf32>
    %187 = arith.subf %181, %184 : vector<1x1xf32>
    %188 = math.exp %187 : vector<1x1xf32>
    %189 = arith.mulf %186, %172 : vector<1x1xf32>
    %cst_81 = arith.constant dense<0.000000e+00> : vector<1xf32>
    %190 = vector.multi_reduction <add>, %188, %cst_81 [1] : vector<1x1xf32> to vector<1xf32>
    %191 = vector.shape_cast %190 : vector<1xf32> to vector<1x1xf32>
    %192 = arith.addf %189, %191 : vector<1x1xf32>
    %193 = vector.broadcast %186 : vector<1x1xf32> to vector<1x32xf32>
    %194 = arith.mulf %193, %173 : vector<1x32xf32>
    %cst_82 = arith.constant dense<0.000000e+00> : vector<1x32xf32>
    %195 = tpu.matmul %188, %175, %cst_82 {dimension_numbers = #tpu.dot_dimension_numbers<[1], [0], [0], [1], [0, 0, 1, 1], [], []>} : vector<1x1xf32>, vector<1x32xf32>, vector<1x32xf32> -> vector<1x32xf32>
    %196 = arith.addf %194, %195 : vector<1x32xf32>
    "tpu.trace_start"() <{level = 10 : i32, message = "qd,kd->qk"}> : () -> ()
    %cst_83 = arith.constant dense<0.000000e+00> : vector<1x4xf32>
    %197 = tpu.matmul %19, %176, %cst_83 {dimension_numbers = #tpu.dot_dimension_numbers<[1], [1], [0], [0], [0, 0, 1, 0], [], []>} : vector<1x32xf32>, vector<4x32xf32>, vector<1x4xf32> -> vector<1x4xf32>
    "tpu.trace_stop"() : () -> ()
    %cst_84 = arith.constant dense<0xFF800000> : vector<1xf32>
    %198 = vector.multi_reduction <maximumf>, %197, %cst_84 [1] : vector<1x4xf32> to vector<1xf32>
    %199 = vector.shape_cast %198 : vector<1xf32> to vector<1x1xf32>
    %200 = arith.maximumf %184, %199 : vector<1x1xf32>
    %201 = arith.subf %184, %200 : vector<1x1xf32>
    %202 = math.exp %201 : vector<1x1xf32>
    %203 = vector.broadcast %200 : vector<1x1xf32> to vector<1x4xf32>
    %204 = arith.subf %197, %203 : vector<1x4xf32>
    %205 = math.exp %204 : vector<1x4xf32>
    %206 = arith.mulf %202, %192 : vector<1x1xf32>
    %cst_85 = arith.constant dense<0.000000e+00> : vector<1xf32>
    %207 = vector.multi_reduction <add>, %205, %cst_85 [1] : vector<1x4xf32> to vector<1xf32>
    %208 = vector.shape_cast %207 : vector<1xf32> to vector<1x1xf32>
    %209 = arith.addf %206, %208 : vector<1x1xf32>
    %210 = vector.broadcast %202 : vector<1x1xf32> to vector<1x32xf32>
    %211 = arith.mulf %210, %196 : vector<1x32xf32>
    %cst_86 = arith.constant dense<0.000000e+00> : vector<1x32xf32>
    %212 = tpu.matmul %205, %177, %cst_86 {dimension_numbers = #tpu.dot_dimension_numbers<[1], [0], [0], [1], [0, 0, 1, 1], [], []>} : vector<1x4xf32>, vector<4x32xf32>, vector<1x32xf32> -> vector<1x32xf32>
    %213 = arith.addf %211, %212 : vector<1x32xf32>
    "tpu.trace_start"() <{level = 10 : i32, message = "qd,kd->qk"}> : () -> ()
    %cst_87 = arith.constant dense<0.000000e+00> : vector<1x8xf32>
    %214 = tpu.matmul %19, %178, %cst_87 {dimension_numbers = #tpu.dot_dimension_numbers<[1], [1], [0], [0], [0, 0, 1, 0], [], []>} : vector<1x32xf32>, vector<8x32xf32>, vector<1x8xf32> -> vector<1x8xf32>
    "tpu.trace_stop"() : () -> ()
    %215 = arith.addf %214, %180 : vector<1x8xf32>
    %cst_88 = arith.constant dense<0xFF800000> : vector<1xf32>
    %216 = vector.multi_reduction <maximumf>, %215, %cst_88 [1] : vector<1x8xf32> to vector<1xf32>
    %217 = vector.shape_cast %216 : vector<1xf32> to vector<1x1xf32>
    %218 = arith.maximumf %200, %217 : vector<1x1xf32>
    %219 = arith.subf %200, %218 : vector<1x1xf32>
    %220 = math.exp %219 : vector<1x1xf32>
    %221 = vector.broadcast %218 : vector<1x1xf32> to vector<1x8xf32>
    %222 = arith.subf %215, %221 : vector<1x8xf32>
    %223 = math.exp %222 : vector<1x8xf32>
    %224 = arith.mulf %220, %209 : vector<1x1xf32>
    %cst_89 = arith.constant dense<0.000000e+00> : vector<1xf32>
    %225 = vector.multi_reduction <add>, %223, %cst_89 [1] : vector<1x8xf32> to vector<1xf32>
    %226 = vector.shape_cast %225 : vector<1xf32> to vector<1x1xf32>
    %227 = arith.addf %224, %226 : vector<1x1xf32>
    %228 = vector.broadcast %220 : vector<1x1xf32> to vector<1x32xf32>
    %229 = arith.mulf %228, %213 : vector<1x32xf32>
    %cst_90 = arith.constant dense<0.000000e+00> : vector<1x32xf32>
    %230 = tpu.matmul %223, %179, %cst_90 {dimension_numbers = #tpu.dot_dimension_numbers<[1], [0], [0], [1], [0, 0, 1, 1], [], []>} : vector<1x8xf32>, vector<8x32xf32>, vector<1x32xf32> -> vector<1x32xf32>
    %231 = arith.addf %229, %230 : vector<1x32xf32>
    %232 = tpu.reciprocal %227 {approx = true} : vector<1x1xf32> -> vector<1x1xf32>
    %233 = vector.broadcast %232 : vector<1x1xf32> to vector<1x32xf32>
    %234 = arith.mulf %231, %233 : vector<1x32xf32>
    %cst_91 = arith.constant dense<0.000000e+00> : vector<1x32xf32>
    %235 = tpu.matmul %234, %9, %cst_91 {dimension_numbers = #tpu.dot_dimension_numbers<[1], [0], [0], [1], [0, 0, 1, 1], [], []>} : vector<1x32xf32>, vector<32x32xf32>, vector<1x32xf32> -> vector<1x32xf32>
    %236 = arith.addf %6, %235 : vector<1x32xf32>
    %237 = arith.addf %236, %10 : vector<1x32xf32>
    %cst_92 = arith.constant dense<0.000000e+00> : vector<1x128xf32>
    %238 = tpu.matmul %237, %11, %cst_92 {dimension_numbers = #tpu.dot_dimension_numbers<[1], [0], [0], [1], [0, 0, 1, 1], [], []>} : vector<1x32xf32>, vector<32x128xf32>, vector<1x128xf32> -> vector<1x128xf32>
    %239 = arith.addf %238, %12 : vector<1x128xf32>
    %240 = vector.extract_strided_slice %14 {offsets = [1, 0], sizes = [1, 1], strides = [1, 1]} : vector<2x1xi32> to vector<1x1xi32>
    %cst_93 = arith.constant dense<0xFF800000> : vector<1xf32>
    %241 = vector.multi_reduction <maximumf>, %239, %cst_93 [1] : vector<1x128xf32> to vector<1xf32>
    %242 = vector.shape_cast %241 : vector<1xf32> to vector<1x1xf32>
    %243 = vector.broadcast %242 : vector<1x1xf32> to vector<1x128xf32>
    %244 = arith.subf %239, %243 : vector<1x128xf32>
    %245 = math.exp %244 : vector<1x128xf32>
    %cst_94 = arith.constant dense<0.000000e+00> : vector<1xf32>
    %246 = vector.multi_reduction <add>, %245, %cst_94 [1] : vector<1x128xf32> to vector<1xf32>
    %247 = vector.shape_cast %246 : vector<1xf32> to vector<1x1xf32>
    %248 = math.log %247 : vector<1x1xf32>
    %249 = arith.addf %242, %248 : vector<1x1xf32>
    %250 = vector.broadcast %240 : vector<1x1xi32> to vector<1x128xi32>
    %251 = arith.cmpi eq, %20, %250 : vector<1x128xi32>
    %252 = arith.extui %251 : vector<1x128xi1> to vector<1x128xi32>
    %253 = arith.sitofp %252 : vector<1x128xi32> to vector<1x128xf32>
    %254 = arith.mulf %239, %253 : vector<1x128xf32>
    %cst_95 = arith.constant dense<0.000000e+00> : vector<1xf32>
    %255 = vector.multi_reduction <add>, %254, %cst_95 [1] : vector<1x128xf32> to vector<1xf32>
    %256 = vector.shape_cast %255 : vector<1xf32> to vector<1x1xf32>
    %c-100_i32_96 = arith.constant -100 : i32
    %257 = vector.broadcast %c-100_i32_96 : i32 to vector<1x1xi32>
    %258 = arith.cmpi ne, %240, %257 : vector<1x1xi32>
    %259 = arith.extui %258 : vector<1x1xi1> to vector<1x1xi32>
    %260 = arith.sitofp %259 : vector<1x1xi32> to vector<1x1xf32>
    %261 = arith.subf %249, %256 : vector<1x1xf32>
    %262 = arith.mulf %261, %260 : vector<1x1xf32>
    %263 = arith.addf %137, %262 : vector<1x1xf32>
    %264 = arith.addf %138, %260 : vector<1x1xf32>
    %265 = vector.broadcast %242 : vector<1x1xf32> to vector<1x128xf32>
    %266 = arith.cmpf oge, %239, %265 : vector<1x128xf32>
    %cst_97 = arith.constant 1.280000e+02 : f32
    %267 = vector.broadcast %cst_97 : f32 to vector<1x128xf32>
    %268 = arith.select %266, %21, %267 : vector<1x128xi1>, vector<1x128xf32>
    %cst_98 = arith.constant dense<0x7F800000> : vector<1xf32>
    %269 = vector.multi_reduction <minimumf>, %268, %cst_98 [1] : vector<1x128xf32> to vector<1xf32>
    %270 = vector.shape_cast %269 : vector<1xf32> to vector<1x1xf32>
    %271 = arith.fptosi %270 : vector<1x1xf32> to vector<1x1xi32>
    %c1_i32 = arith.constant 1 : i32
    %272 = vector.broadcast %c1_i32 : i32 to vector<1x2xi32>
    %273 = arith.cmpi eq, %22, %272 : vector<1x2xi32>
    %274 = arith.extui %273 : vector<1x2xi1> to vector<1x2xi32>
    %275 = vector.broadcast %271 : vector<1x1xi32> to vector<1x2xi32>
    %276 = arith.muli %275, %274 : vector<1x2xi32>
    %277 = arith.addi %151, %276 : vector<1x2xi32>
    %c0_99 = arith.constant 0 : index
    %c0_100 = arith.constant 0 : index
    %278 = vector.load %arg18[%c0_99, %c0_100] : memref<1x1xf32, #tpu.memory_space<vmem>>, vector<1x1xf32>
    tpu.vector_store %arg18[%c0_99, %c0_100], %263 {strides = array<i32>} : memref<1x1xf32, #tpu.memory_space<vmem>>, vector<1x1xf32>,
    %c0_101 = arith.constant 0 : index
    %c0_102 = arith.constant 0 : index
    %279 = vector.load %arg19[%c0_101, %c0_102] : memref<1x1xf32, #tpu.memory_space<vmem>>, vector<1x1xf32>
    tpu.vector_store %arg19[%c0_101, %c0_102], %264 {strides = array<i32>} : memref<1x1xf32, #tpu.memory_space<vmem>>, vector<1x1xf32>,
    %c0_103 = arith.constant 0 : index
    %c0_104 = arith.constant 0 : index
    %280 = vector.load %arg20[%c0_103, %c0_104] : memref<1x2xi32, #tpu.memory_space<vmem>>, vector<1x2xi32>
    tpu.vector_store %arg20[%c0_103, %c0_104], %277 {strides = array<i32>} : memref<1x2xi32, #tpu.memory_space<vmem>>, vector<1x2xi32>,
    return
  }
  func.func @transform_0(%arg0: i32) -> (i32, i32, i32) {
    %c0_i32 = arith.constant 0 : i32
    %c0_i32_0 = arith.constant 0 : i32
    %c0_i32_1 = arith.constant 0 : i32
    %c0_i32_2 = arith.constant 0 : i32
    return %c0_i32, %c0_i32_0, %c0_i32_1 : i32, i32, i32
  }
  func.func @transform_1(%arg0: i32) -> (i32, i32, i32) {
    %c0_i32 = arith.constant 0 : i32
    %c0_i32_0 = arith.constant 0 : i32
    %c0_i32_1 = arith.constant 0 : i32
    %c0_i32_2 = arith.constant 0 : i32
    return %c0_i32, %c0_i32_0, %c0_i32_1 : i32, i32, i32
  }
  func.func @transform_2(%arg0: i32) -> (i32, i32) {
    %c0_i32 = arith.constant 0 : i32
    %c0_i32_0 = arith.constant 0 : i32
    %c0_i32_1 = arith.constant 0 : i32
    return %c0_i32, %c0_i32_0 : i32, i32
  }
  func.func @transform_3(%arg0: i32) -> (i32, i32) {
    %c0_i32 = arith.constant 0 : i32
    %c0_i32_0 = arith.constant 0 : i32
    %c0_i32_1 = arith.constant 0 : i32
    return %c0_i32, %c0_i32_0 : i32, i32
  }
  func.func @transform_4(%arg0: i32) -> (i32, i32) {
    %c0_i32 = arith.constant 0 : i32
    %c0_i32_0 = arith.constant 0 : i32
    %c0_i32_1 = arith.constant 0 : i32
    return %c0_i32, %c0_i32_0 : i32, i32
  }
  func.func @transform_5(%arg0: i32) -> (i32, i32) {
    %c0_i32 = arith.constant 0 : i32
    %c0_i32_0 = arith.constant 0 : i32
    %c0_i32_1 = arith.constant 0 : i32
    return %c0_i32, %c0_i32_0 : i32, i32
  }
  func.func @transform_6(%arg0: i32) -> (i32, i32) {
    %c0_i32 = arith.constant 0 : i32
    %c0_i32_0 = arith.constant 0 : i32
    %c0_i32_1 = arith.constant 0 : i32
    return %c0_i32, %c0_i32_0 : i32, i32
  }
  func.func @transform_7(%arg0: i32) -> (i32, i32) {
    %c0_i32 = arith.constant 0 : i32
    %c0_i32_0 = arith.constant 0 : i32
    %c0_i32_1 = arith.constant 0 : i32
    return %c0_i32, %c0_i32_0 : i32, i32
  }
  func.func @transform_8(%arg0: i32) -> (i32, i32) {
    %c0_i32 = arith.constant 0 : i32
    %c0_i32_0 = arith.constant 0 : i32
    %c0_i32_1 = arith.constant 0 : i32
    return %c0_i32, %c0_i32_0 : i32, i32
  }
  func.func @transform_9(%arg0: i32) -> (i32, i32) {
    %c0_i32 = arith.constant 0 : i32
    %c0_i32_0 = arith.constant 0 : i32
    %c0_i32_1 = arith.constant 0 : i32
    return %c0_i32, %c0_i32_0 : i32, i32
  }
  func.func @transform_10(%arg0: i32) -> (i32, i32) {
    %c0_i32 = arith.constant 0 : i32
    %c0_i32_0 = arith.constant 0 : i32
    %c0_i32_1 = arith.constant 0 : i32
    return %c0_i32, %c0_i32_0 : i32, i32
  }
  func.func @transform_11(%arg0: i32) -> (i32, i32) {
    %c0_i32 = arith.constant 0 : i32
    %c0_i32_0 = arith.constant 0 : i32
    %c0_i32_1 = arith.constant 0 : i32
    return %c0_i32, %c0_i32_0 : i32, i32
  }
  func.func @transform_12(%arg0: i32) -> (i32, i32) {
    %c0_i32 = arith.constant 0 : i32
    %c0_i32_0 = arith.constant 0 : i32
    %c0_i32_1 = arith.constant 0 : i32
    return %c0_i32, %c0_i32_0 : i32, i32
  }
  func.func @transform_13(%arg0: i32) -> (i32, i32) {
    %c0_i32 = arith.constant 0 : i32
    %c0_i32_0 = arith.constant 0 : i32
    %c0_i32_1 = arith.constant 0 : i32
    return %c0_i32, %c0_i32_0 : i32, i32
  }
  func.func @transform_14(%arg0: i32) -> (i32, i32) {
    %c0_i32 = arith.constant 0 : i32
    %c0_i32_0 = arith.constant 0 : i32
    %c0_i32_1 = arith.constant 0 : i32
    return %c0_i32, %c0_i32_0 : i32, i32
  }
  func.func @transform_15(%arg0: i32) -> (i32, i32) {
    %c0_i32 = arith.constant 0 : i32
    %c0_i32_0 = arith.constant 0 : i32
    %c0_i32_1 = arith.constant 0 : i32
    return %c0_i32, %c0_i32_0 : i32, i32
  }
  func.func @transform_16(%arg0: i32) -> (i32, i32) {
    %c0_i32 = arith.constant 0 : i32
    %c0_i32_0 = arith.constant 0 : i32
    %c0_i32_1 = arith.constant 0 : i32
    return %c0_i32, %c0_i32_0 : i32, i32
  }
  func.func @transform_17(%arg0: i32) -> (i32, i32) {
    %c0_i32 = arith.constant 0 : i32
    %c0_i32_0 = arith.constant 0 : i32
    %c0_i32_1 = arith.constant 0 : i32
    return %c0_i32, %c0_i32_0 : i32, i32
  }
  func.func @transform_18(%arg0: i32) -> (i32, i32) {
    %c0_i32 = arith.constant 0 : i32
    %c0_i32_0 = arith.constant 0 : i32
    %c0_i32_1 = arith.constant 0 : i32
    return %c0_i32, %c0_i32_0 : i32, i32
  }
  func.func @transform_19(%arg0: i32) -> (i32, i32) {
    %c0_i32 = arith.constant 0 : i32
    %c0_i32_0 = arith.constant 0 : i32
    %c0_i32_1 = arith.constant 0 : i32
    return %c0_i32, %c0_i32_0 : i32, i32
  }
}

</mosaic_0001>

<llo_original>
// kernel: forward.1
$region0: #{forward.1}
  #allocation0 [shape = 'u32[]', space=smem, size = 0x4, offset = 0x4, fixed_abs, tag = 'smem constant byte address 0x4 - core index']
  #allocation1 [shape = 'u32[144,128]{1,0:T(1,128)}', space=vmem, size = 0x12000, scoped, tag = 'internal scratch']
  %s0 = inlined_call_operand.vmem [shape: f32[2,4,192], index: 0, kind: input, shape index: {}]
  %s1 = inlined_call_operand.vmem [shape: f32[2,8,64], index: 1, kind: input, shape index: {}]
  %s2 = inlined_call_operand.vmem [shape: f32[2,8], index: 2, kind: input, shape index: {}]
  %s3 = inlined_call_operand.vmem [shape: s32[2,1], index: 3, kind: input, shape index: {}]
  %s4 = inlined_call_operand.vmem [shape: f32[192,48], index: 4, kind: input, shape index: {}]
  %s5 = inlined_call_operand.vmem [shape: f32[1,48], index: 5, kind: input, shape index: {}]
  %s6 = inlined_call_operand.vmem [shape: f32[48,32], index: 6, kind: input, shape index: {}]
  %s7 = inlined_call_operand.vmem [shape: f32[1,32], index: 7, kind: input, shape index: {}]
  %s8 = inlined_call_operand.vmem [shape: f32[64,32], index: 8, kind: input, shape index: {}]
  %s9 = inlined_call_operand.vmem [shape: f32[1,32], index: 9, kind: input, shape index: {}]
  %s10 = inlined_call_operand.vmem [shape: f32[1,32], index: 10, kind: input, shape index: {}]
  %s11 = inlined_call_operand.vmem [shape: f32[32,96], index: 11, kind: input, shape index: {}]
  %s12 = inlined_call_operand.vmem [shape: f32[1,96], index: 12, kind: input, shape index: {}]
  %s13 = inlined_call_operand.vmem [shape: f32[32,32], index: 13, kind: input, shape index: {}]
  %s14 = inlined_call_operand.vmem [shape: f32[1,32], index: 14, kind: input, shape index: {}]
  %s15 = inlined_call_operand.vmem [shape: f32[32,128], index: 15, kind: input, shape index: {}]
  %s16 = inlined_call_operand.vmem [shape: f32[1,128], index: 16, kind: input, shape index: {}]
  %s17 = inlined_call_operand.hbm [shape: f32[1,1], index: 17, kind: output, shape index: {0}]
  %s18 = inlined_call_operand.hbm [shape: f32[1,1], index: 18, kind: output, shape index: {1}]
  %s19 = inlined_call_operand.hbm [shape: s32[1,2], index: 19, kind: output, shape index: {2}]
  %20 = xla_tuple %s17, %s18, %s19
  %s21 = sld [smem:[#allocation0]]
  $region94: #{forward.1} parent=0
    _
  %s23 = ssub.s32 1, %s21
  %s24 = scalar_select 0, %s23, %s21
  $region1: #{forward.1} parent=0
    #allocation2 [shape = 'u8[512]{0}', space=vmem, size = 0x400, scoped, tag = 'output window, operand 0, single buffered']
    #allocation3 [shape = 's32[1]{0}', space=sflag, size = 0x4, scoped, tag = 'scoped memory for forward.1']
    #allocation4 [shape = 'u8[512]{0}', space=vmem, size = 0x400, scoped, tag = 'output window, operand 1, single buffered']
    #allocation5 [shape = 's32[1]{0}', space=sflag, size = 0x4, scoped, tag = 'scoped memory for forward.1']
    #allocation6 [shape = 'u8[512]{0}', space=vmem, size = 0x400, scoped, tag = 'output window, operand 2, single buffered']
    %25 = vsyncpa [#allocation3], 0
    %26 = vsyncpa [#allocation5], 0
    // Predicated region
    $region2: #{forward.1} parent=1 // pred_check
      _
    $region3: #{forward.1} parent=1 // pred_check_branch
      %28 = sbr.rel (0) target = $region5
    $region4: #{forward.1} parent=1 // pred_region
      _
    $region5: #{forward.1} parent=1 // pred_fallthru
      _
    // Predicated region
    $region6: #{forward.1} parent=1 // pred_check
      _
    $region7: #{forward.1} parent=1 // pred_check_branch
      %30 = sbr.rel (0) target = $region9
    $region8: #{forward.1} parent=1 // pred_region
      _
    $region9: #{forward.1} parent=1 // pred_fallthru
      _
    // Predicated region
    $region10: #{forward.1} parent=1 // pred_check
      _
    $region11: #{forward.1} parent=1 // pred_check_branch
      %32 = sbr.rel (0) target = $region13
    $region12: #{forward.1} parent=1 // pred_region
      _
    $region13: #{forward.1} parent=1 // pred_fallthru
      _
    // Predicated region
    $region14: #{forward.1} parent=1 // pred_check
      _
    $region15: #{forward.1} parent=1 // pred_check_branch
      %34 = sbr.rel (0) target = $region17
    $region16: #{forward.1} parent=1 // pred_region
      _
    $region17: #{forward.1} parent=1 // pred_fallthru
      _
    // Predicated region
    $region18: #{forward.1} parent=1 // pred_check
      _
    $region19: #{forward.1} parent=1 // pred_check_branch
      %36 = sbr.rel (0) target = $region21
    $region20: #{forward.1} parent=1 // pred_region
      _
    $region21: #{forward.1} parent=1 // pred_fallthru
      _
    // Predicated region
    $region22: #{forward.1} parent=1 // pred_check
      _
    $region23: #{forward.1} parent=1 // pred_check_branch
      %38 = sbr.rel (0) target = $region25
    $region24: #{forward.1} parent=1 // pred_region
      _
    $region25: #{forward.1} parent=1 // pred_fallthru
      _
    // Predicated region
    $region26: #{forward.1} parent=1 // pred_check
      _
    $region27: #{forward.1} parent=1 // pred_check_branch
      %40 = sbr.rel (0) target = $region29
    $region28: #{forward.1} parent=1 // pred_region
      _
    $region29: #{forward.1} parent=1 // pred_fallthru
      _
    // Predicated region
    $region30: #{forward.1} parent=1 // pred_check
      _
    $region31: #{forward.1} parent=1 // pred_check_branch
      %42 = sbr.rel (0) target = $region33
    $region32: #{forward.1} parent=1 // pred_region
      _
    $region33: #{forward.1} parent=1 // pred_fallthru
      _
    // Predicated region
    $region34: #{forward.1} parent=1 // pred_check
      _
    $region35: #{forward.1} parent=1 // pred_check_branch
      %44 = sbr.rel (0) target = $region37
    $region36: #{forward.1} parent=1 // pred_region
      _
    $region37: #{forward.1} parent=1 // pred_fallthru
      _
    // Predicated region
    $region38: #{forward.1} parent=1 // pred_check
      _
    $region39: #{forward.1} parent=1 // pred_check_branch
      %46 = sbr.rel (0) target = $region41
    $region40: #{forward.1} parent=1 // pred_region
      _
    $region41: #{forward.1} parent=1 // pred_fallthru
      _
    // Predicated region
    $region42: #{forward.1} parent=1 // pred_check
      _
    $region43: #{forward.1} parent=1 // pred_check_branch
      %48 = sbr.rel (0) target = $region45
    $region44: #{forward.1} parent=1 // pred_region
      _
    $region45: #{forward.1} parent=1 // pred_fallthru
      _
    // Predicated region
    $region46: #{forward.1} parent=1 // pred_check
      _
    $region47: #{forward.1} parent=1 // pred_check_branch
      %50 = sbr.rel (0) target = $region49
    $region48: #{forward.1} parent=1 // pred_region
      _
    $region49: #{forward.1} parent=1 // pred_fallthru
      _
    // Predicated region
    $region50: #{forward.1} parent=1 // pred_check
      _
    $region51: #{forward.1} parent=1 // pred_check_branch
      %52 = sbr.rel (0) target = $region53
    $region52: #{forward.1} parent=1 // pred_region
      _
    $region53: #{forward.1} parent=1 // pred_fallthru
      _
    // Predicated region
    $region54: #{forward.1} parent=1 // pred_check
      _
    $region55: #{forward.1} parent=1 // pred_check_branch
      %54 = sbr.rel (0) target = $region57
    $region56: #{forward.1} parent=1 // pred_region
      _
    $region57: #{forward.1} parent=1 // pred_fallthru
      _
    // Predicated region
    $region58: #{forward.1} parent=1 // pred_check
      _
    $region59: #{forward.1} parent=1 // pred_check_branch
      %56 = sbr.rel (0) target = $region61
    $region60: #{forward.1} parent=1 // pred_region
      _
    $region61: #{forward.1} parent=1 // pred_fallthru
      _
    // Predicated region
    $region62: #{forward.1} parent=1 // pred_check
      _
    $region63: #{forward.1} parent=1 // pred_check_branch
      %58 = sbr.rel (0) target = $region65
    $region64: #{forward.1} parent=1 // pred_region
      _
    $region65: #{forward.1} parent=1 // pred_fallthru
      _
    // Predicated region
    $region66: #{forward.1} parent=1 // pred_check
      _
    $region67: #{forward.1} parent=1 // pred_check_branch
      %60 = sbr.rel (0) target = $region69
    $region68: #{forward.1} parent=1 // pred_region
      _
    $region69: #{forward.1} parent=1 // pred_fallthru
      _
    %v61 = vld [vmem:[%s4] sm:$0xff]
    %v62 = vld [vmem:[%s4 + $0x8] sm:$0xff]
    %v63 = vld [vmem:[%s4 + $0x10] sm:$0xff]
    %v64 = vld [vmem:[%s4 + $0x18] sm:$0xff]
    %v65 = vld [vmem:[%s4 + $0x20] sm:$0xff]
    %v66 = vld [vmem:[%s4 + $0x28] sm:$0xff]
    %v67 = vld [vmem:[%s4 + $0x30] sm:$0xff]
    %v68 = vld [vmem:[%s4 + $0x38] sm:$0xff]
    %v69 = vld [vmem:[%s4 + $0x40] sm:$0xff]
    %v70 = vld [vmem:[%s4 + $0x48] sm:$0xff]
    %v71 = vld [vmem:[%s4 + $0x50] sm:$0xff]
    %v72 = vld [vmem:[%s4 + $0x58] sm:$0xff]
    %v73 = vld [vmem:[%s4 + $0x60] sm:$0xff]
    %v74 = vld [vmem:[%s4 + $0x68] sm:$0xff]
    %v75 = vld [vmem:[%s4 + $0x70] sm:$0xff]
    %v76 = vld [vmem:[%s4 + $0x78] sm:$0xff]
    %v77 = vld [vmem:[%s4 + $0x80] sm:$0xff]
    %v78 = vld [vmem:[%s4 + $0x88] sm:$0xff]
    %v79 = vld [vmem:[%s4 + $0x90] sm:$0xff]
    %v80 = vld [vmem:[%s4 + $0x98] sm:$0xff]
    %v81 = vld [vmem:[%s4 + $0xa0] sm:$0xff]
    %v82 = vld [vmem:[%s4 + $0xa8] sm:$0xff]
    %v83 = vld [vmem:[%s4 + $0xb0] sm:$0xff]
    %v84 = vld [vmem:[%s4 + $0xb8] sm:$0xff]
    %v85 = vld [vmem:[%s5] sm:$0x1]
    %v86 = vld [vmem:[%s6] sm:$0xff]
    %v87 = vld [vmem:[%s6 + $0x8] sm:$0xff]
    %v88 = vld [vmem:[%s6 + $0x10] sm:$0xff]
    %v89 = vld [vmem:[%s6 + $0x18] sm:$0xff]
    %v90 = vld [vmem:[%s6 + $0x20] sm:$0xff]
    %v91 = vld [vmem:[%s6 + $0x28] sm:$0xff]
    %v92 = vld [vmem:[%s7] sm:$0x1]
    %v93 = vld [vmem:[%s8] sm:$0xff]
    %v94 = vld [vmem:[%s8 + $0x8] sm:$0xff]
    %v95 = vld [vmem:[%s8 + $0x10] sm:$0xff]
    %v96 = vld [vmem:[%s8 + $0x18] sm:$0xff]
    %v97 = vld [vmem:[%s8 + $0x20] sm:$0xff]
    %v98 = vld [vmem:[%s8 + $0x28] sm:$0xff]
    %v99 = vld [vmem:[%s8 + $0x30] sm:$0xff]
    %v100 = vld [vmem:[%s8 + $0x38] sm:$0xff]
    %v101 = vld [vmem:[%s9] sm:$0x1]
    %v102 = vld [vmem:[%s10] sm:$0x1]
    %v103 = vld [vmem:[%s11] sm:$0xff]
    %v104 = vld [vmem:[%s11 + $0x8] sm:$0xff]
    %v105 = vld [vmem:[%s11 + $0x10] sm:$0xff]
    %v106 = vld [vmem:[%s11 + $0x18] sm:$0xff]
    %v107 = vld [vmem:[%s12] sm:$0x1]
    %v108 = vld [vmem:[%s13] sm:$0xff]
    %v109 = vld [vmem:[%s13 + $0x8] sm:$0xff]
    %v110 = vld [vmem:[%s13 + $0x10] sm:$0xff]
    %v111 = vld [vmem:[%s13 + $0x18] sm:$0xff]
    %v112 = vld [vmem:[%s14] sm:$0x1]
    %v113 = vld [vmem:[%s15] sm:$0xff]
    %v114 = vld [vmem:[%s15 + $0x8] sm:$0xff]
    %v115 = vld [vmem:[%s15 + $0x10] sm:$0xff]
    %v116 = vld [vmem:[%s15 + $0x18] sm:$0xff]
    %v117 = vld [vmem:[%s16] sm:$0x1]
    %v118 = vld [vmem:[%s2] sm:$0x3]
    %v119 = vld [vmem:[%s3] sm:$0x3]
    %vm120 = vcmask 261120
    %v122 = vsel %vm120, %v102, 0
    %124 = vmatprep.subr.mxu0 0.0
    %125 = vmatpush1.msra.mxu0 %v103
    %126 = vmatprep.subr.mxu0 0.0
    %127 = vmatpush1.msra.mxu0 %v104
    %128 = vmatprep.subr.mxu0 0.0
    %129 = vmatpush1.msra.mxu0 %v105
    %130 = vmatprep.subr.mxu0 0.0
    %131 = vmatpush1.msra.mxu0 %v106
    %132 = vmatprep.subr.mxu0 0.0
    %133 = vmatpush1.msra.mxu0 0.0
    %134 = vmatprep.subr.mxu0 0.0
    %135 = vmatpush1.msra.mxu0 0.0
    %136 = vmatprep.subr.mxu0 0.0
    %137 = vmatpush1.msra.mxu0 0.0
    %138 = vmatprep.subr.mxu0 0.0
    %139 = vmatpush1.msra.mxu0 0.0
    %140 = vmatprep.subr.mxu0 0.0
    %141 = vmatpush1.msra.mxu0 0.0
    %142 = vmatprep.subr.mxu0 0.0
    %143 = vmatpush1.msra.mxu0 0.0
    %144 = vmatprep.subr.mxu0 0.0
    %145 = vmatpush1.msra.mxu0 0.0
    %146 = vmatprep.subr.mxu0 0.0
    %147 = vmatpush1.msra.mxu0 0.0
    %148 = vmatprep.subr.mxu0 0.0
    %149 = vmatpush1.msra.mxu0 0.0
    %150 = vmatprep.subr.mxu0 0.0
    %151 = vmatpush1.msra.mxu0 0.0
    %152 = vmatprep.subr.mxu0 0.0
    %153 = vmatpush1.msra.mxu0 0.0
    %154 = vmatprep.subr.mxu0 0.0
    %155 = vmatpush1.msra.mxu0 0.0
    %156 = vmatprep.subr.mxu0 0.0
    %157 = vmatpush1.msra.mxu0 0.0
    %158 = vmatprep.subr.mxu0 0.0
    %159 = vmatpush1.msra.mxu0 0.0
    %160 = vmatprep.subr.mxu0 0.0
    %161 = vmatpush1.msra.mxu0 0.0
    %162 = vmatprep.subr.mxu0 0.0
    %163 = vmatpush1.msra.mxu0 0.0
    %164 = vmatprep.subr.mxu0 0.0
    %165 = vmatpush1.msra.mxu0 0.0
    %166 = vmatprep.subr.mxu0 0.0
    %167 = vmatpush1.msra.mxu0 0.0
    %168 = vmatprep.subr.mxu0 0.0
    %169 = vmatpush1.msra.mxu0 0.0
    %170 = vmatprep.subr.mxu0 0.0
    %171 = vmatpush1.msra.mxu0 0.0
    %172 = vmatprep.subr.mxu0 0.0
    %173 = vmatpush1.msra.mxu0 0.0
    %174 = vmatprep.subr.mxu0 0.0
    %175 = vmatpush1.msra.mxu0 0.0
    %176 = vmatprep.subr.mxu0 0.0
    %177 = vmatpush1.msra.mxu0 0.0
    %178 = vmatprep.subr.mxu0 0.0
    %179 = vmatpush1.msra.mxu0 0.0
    %180 = vmatprep.subr.mxu0 0.0
    %181 = vmatpush1.msra.mxu0 0.0
    %182 = vmatprep.subr.mxu0 0.0
    %183 = vmatpush1.msra.mxu0 0.0
    %184 = vmatprep.subr.mxu0 0.0
    %185 = vmatpush1.msra.mxu0 0.0
    %186 = vmatprep.subr.mxu0 0.0
    %187 = vmatpush1.msra.mxu0 0.0
    %188 = vmatprep.mubr.f32.mxu0 0.0
    %189 = vmatmul.mubr.f32.gmra.mrb[0].mxu0 %v122
    %v190 = vpop.f32.mrb[0].mxu0
    %v191 = vadd.f32 %v107, %v190
    %v192 = vpop.f32.mrb[0].mxu0
    %193 = vdwg.mxu0
    %v194 = vmul.f32 %v191, 0.17677669
    %v195 = vlaneseq
    %v196 = vand.u32 %v195, 127
    %v197 = vcvt.s32.f32 %v196
    %v198 = vld [vmem:[%s0] sm:$0xff]
    %v200 = vlaneseq
    %v201 = vshrl.u32 %v200, 7
    %v202 = vsub.s32 0, %v201
    %v203 = vrot.slane %v85, %v202
    %v206 = vcombine.high %v198, %v198
    %vm207 = vcmask 523264
    %v208 = vsel %vm207, %v206, 0
    %210 = vmatprep.subr.mxu0 0.0
    %211 = vmatpush1.msra.mxu0 %v61
    %212 = vmatprep.subr.mxu0 0.0
    %213 = vmatpush1.msra.mxu0 %v62
    %214 = vmatprep.subr.mxu0 0.0
    %215 = vmatpush1.msra.mxu0 %v63
    %216 = vmatprep.subr.mxu0 0.0
    %217 = vmatpush1.msra.mxu0 %v64
    %218 = vmatprep.subr.mxu0 0.0
    %219 = vmatpush1.msra.mxu0 %v65
    %220 = vmatprep.subr.mxu0 0.0
    %221 = vmatpush1.msra.mxu0 %v66
    %222 = vmatprep.subr.mxu0 0.0
    %223 = vmatpush1.msra.mxu0 %v67
    %224 = vmatprep.subr.mxu0 0.0
    %225 = vmatpush1.msra.mxu0 %v68
    %226 = vmatprep.subr.mxu0 0.0
    %227 = vmatpush1.msra.mxu0 %v69
    %228 = vmatprep.subr.mxu0 0.0
    %229 = vmatpush1.msra.mxu0 %v70
    %230 = vmatprep.subr.mxu0 0.0
    %231 = vmatpush1.msra.mxu0 %v71
    %232 = vmatprep.subr.mxu0 0.0
    %233 = vmatpush1.msra.mxu0 %v72
    %234 = vmatprep.subr.mxu0 0.0
    %235 = vmatpush1.msra.mxu0 %v73
    %236 = vmatprep.subr.mxu0 0.0
    %237 = vmatpush1.msra.mxu0 %v74
    %238 = vmatprep.subr.mxu0 0.0
    %239 = vmatpush1.msra.mxu0 %v75
    %240 = vmatprep.subr.mxu0 0.0
    %241 = vmatpush1.msra.mxu0 %v76
    %242 = vmatprep.subr.mxu0 0.0
    %243 = vmatpush1.msra.mxu0 %v77
    %244 = vmatprep.subr.mxu0 0.0
    %245 = vmatpush1.msra.mxu0 %v78
    %246 = vmatprep.subr.mxu0 0.0
    %247 = vmatpush1.msra.mxu0 %v79
    %248 = vmatprep.subr.mxu0 0.0
    %249 = vmatpush1.msra.mxu0 %v80
    %250 = vmatprep.subr.mxu0 0.0
    %251 = vmatpush1.msra.mxu0 %v81
    %252 = vmatprep.subr.mxu0 0.0
    %253 = vmatpush1.msra.mxu0 %v82
    %254 = vmatprep.subr.mxu0 0.0
    %255 = vmatpush1.msra.mxu0 %v83
    %256 = vmatprep.subr.mxu0 0.0
    %257 = vmatpush1.msra.mxu0 %v84
    %258 = vmatprep.subr.mxu0 0.0
    %259 = vmatpush1.msra.mxu0 0.0
    %260 = vmatprep.subr.mxu0 0.0
    %261 = vmatpush1.msra.mxu0 0.0
    %262 = vmatprep.subr.mxu0 0.0
    %263 = vmatpush1.msra.mxu0 0.0
    %264 = vmatprep.subr.mxu0 0.0
    %265 = vmatpush1.msra.mxu0 0.0
    %266 = vmatprep.subr.mxu0 0.0
    %267 = vmatpush1.msra.mxu0 0.0
    %268 = vmatprep.subr.mxu0 0.0
    %269 = vmatpush1.msra.mxu0 0.0
    %270 = vmatprep.subr.mxu0 0.0
    %271 = vmatpush1.msra.mxu0 0.0
    %272 = vmatprep.subr.mxu0 0.0
    %273 = vmatpush1.msra.mxu0 0.0
    %274 = vmatprep.mubr.f32.mxu0 %v208
    %275 = vmatmul.mubr.f32.gmra.mrb[0].mxu0 %v198
    %v276 = vpop.f32.mrb[0].mxu0
    %v277 = vadd.f32 %v203, %v276
    %v278 = vpop.f32.mrb[0].mxu0
    %279 = vdwg.mxu0
    %v281 = vlaneseq
    %v282 = vshrl.u32 %v281, 7
    %v283 = vsub.s32 0, %v282
    %v284 = vrot.slane %v92, %v283
    %vm286 = vcmask 392192
    %v288 = vsel %vm286, %v277, 0
    %290 = vmatprep.subr.mxu0 0.0
    %291 = vmatpush1.msra.mxu0 %v86
    %292 = vmatprep.subr.mxu0 0.0
    %293 = vmatpush1.msra.mxu0 %v87
    %294 = vmatprep.subr.mxu0 0.0
    %295 = vmatpush1.msra.mxu0 %v88
    %296 = vmatprep.subr.mxu0 0.0
    %297 = vmatpush1.msra.mxu0 %v89
    %298 = vmatprep.subr.mxu0 0.0
    %299 = vmatpush1.msra.mxu0 %v90
    %300 = vmatprep.subr.mxu0 0.0
    %301 = vmatpush1.msra.mxu0 %v91
    %302 = vmatprep.subr.mxu0 0.0
    %303 = vmatpush1.msra.mxu0 0.0
    %304 = vmatprep.subr.mxu0 0.0
    %305 = vmatpush1.msra.mxu0 0.0
    %306 = vmatprep.subr.mxu0 0.0
    %307 = vmatpush1.msra.mxu0 0.0
    %308 = vmatprep.subr.mxu0 0.0
    %309 = vmatpush1.msra.mxu0 0.0
    %310 = vmatprep.subr.mxu0 0.0
    %311 = vmatpush1.msra.mxu0 0.0
    %312 = vmatprep.subr.mxu0 0.0
    %313 = vmatpush1.msra.mxu0 0.0
    %314 = vmatprep.subr.mxu0 0.0
    %315 = vmatpush1.msra.mxu0 0.0
    %316 = vmatprep.subr.mxu0 0.0
    %317 = vmatpush1.msra.mxu0 0.0
    %318 = vmatprep.subr.mxu0 0.0
    %319 = vmatpush1.msra.mxu0 0.0
    %320 = vmatprep.subr.mxu0 0.0
    %321 = vmatpush1.msra.mxu0 0.0
    %322 = vmatprep.subr.mxu0 0.0
    %323 = vmatpush1.msra.mxu0 0.0
    %324 = vmatprep.subr.mxu0 0.0
    %325 = vmatpush1.msra.mxu0 0.0
    %326 = vmatprep.subr.mxu0 0.0
    %327 = vmatpush1.msra.mxu0 0.0
    %328 = vmatprep.subr.mxu0 0.0
    %329 = vmatpush1.msra.mxu0 0.0
    %330 = vmatprep.subr.mxu0 0.0
    %331 = vmatpush1.msra.mxu0 0.0
    %332 = vmatprep.subr.mxu0 0.0
    %333 = vmatpush1.msra.mxu0 0.0
    %334 = vmatprep.subr.mxu0 0.0
    %335 = vmatpush1.msra.mxu0 0.0
    %336 = vmatprep.subr.mxu0 0.0
    %337 = vmatpush1.msra.mxu0 0.0
    %338 = vmatprep.subr.mxu0 0.0
    %339 = vmatpush1.msra.mxu0 0.0
    %340 = vmatprep.subr.mxu0 0.0
    %341 = vmatpush1.msra.mxu0 0.0
    %342 = vmatprep.subr.mxu0 0.0
    %343 = vmatpush1.msra.mxu0 0.0
    %344 = vmatprep.subr.mxu0 0.0
    %345 = vmatpush1.msra.mxu0 0.0
    %346 = vmatprep.subr.mxu0 0.0
    %347 = vmatpush1.msra.mxu0 0.0
    %348 = vmatprep.subr.mxu0 0.0
    %349 = vmatpush1.msra.mxu0 0.0
    %350 = vmatprep.subr.mxu0 0.0
    %351 = vmatpush1.msra.mxu0 0.0
    %352 = vmatprep.subr.mxu0 0.0
    %353 = vmatpush1.msra.mxu0 0.0
    %354 = vmatprep.mubr.f32.mxu0 0.0
    %355 = vmatmul.mubr.f32.gmra.mrb[0].mxu0 %v288
    %v356 = vpop.f32.mrb[0].mxu0
    %v357 = vadd.f32 %v284, %v356
    %v358 = vpop.f32.mrb[0].mxu0
    %359 = vdwg.mxu0
    %v360 = vld [vmem:[%s1] sm:$0xff]
    %v362 = vlaneseq
    %v363 = vshrl.u32 %v362, 7
    %v364 = vsub.s32 0, %v363
    %v365 = vrot.slane %v101, %v364
    %v368 = vsel %vm207, %v360, 0
    %370 = vmatprep.subr.mxu0 0.0
    %371 = vmatpush1.msra.mxu0 %v93
    %372 = vmatprep.subr.mxu0 0.0
    %373 = vmatpush1.msra.mxu0 %v94
    %374 = vmatprep.subr.mxu0 0.0
    %375 = vmatpush1.msra.mxu0 %v95
    %376 = vmatprep.subr.mxu0 0.0
    %377 = vmatpush1.msra.mxu0 %v96
    %378 = vmatprep.subr.mxu0 0.0
    %379 = vmatpush1.msra.mxu0 %v97
    %380 = vmatprep.subr.mxu0 0.0
    %381 = vmatpush1.msra.mxu0 %v98
    %382 = vmatprep.subr.mxu0 0.0
    %383 = vmatpush1.msra.mxu0 %v99
    %384 = vmatprep.subr.mxu0 0.0
    %385 = vmatpush1.msra.mxu0 %v100
    %386 = vmatprep.subr.mxu0 0.0
    %387 = vmatpush1.msra.mxu0 0.0
    %388 = vmatprep.subr.mxu0 0.0
    %389 = vmatpush1.msra.mxu0 0.0
    %390 = vmatprep.subr.mxu0 0.0
    %391 = vmatpush1.msra.mxu0 0.0
    %392 = vmatprep.subr.mxu0 0.0
    %393 = vmatpush1.msra.mxu0 0.0
    %394 = vmatprep.subr.mxu0 0.0
    %395 = vmatpush1.msra.mxu0 0.0
    %396 = vmatprep.subr.mxu0 0.0
    %397 = vmatpush1.msra.mxu0 0.0
    %398 = vmatprep.subr.mxu0 0.0
    %399 = vmatpush1.msra.mxu0 0.0
    %400 = vmatprep.subr.mxu0 0.0
    %401 = vmatpush1.msra.mxu0 0.0
    %402 = vmatprep.subr.mxu0 0.0
    %403 = vmatpush1.msra.mxu0 0.0
    %404 = vmatprep.subr.mxu0 0.0
    %405 = vmatpush1.msra.mxu0 0.0
    %406 = vmatprep.subr.mxu0 0.0
    %407 = vmatpush1.msra.mxu0 0.0
    %408 = vmatprep.subr.mxu0 0.0
    %409 = vmatpush1.msra.mxu0 0.0
    %410 = vmatprep.subr.mxu0 0.0
    %411 = vmatpush1.msra.mxu0 0.0
    %412 = vmatprep.subr.mxu0 0.0
    %413 = vmatpush1.msra.mxu0 0.0
    %414 = vmatprep.subr.mxu0 0.0
    %415 = vmatpush1.msra.mxu0 0.0
    %416 = vmatprep.subr.mxu0 0.0
    %417 = vmatpush1.msra.mxu0 0.0
    %418 = vmatprep.subr.mxu0 0.0
    %419 = vmatpush1.msra.mxu0 0.0
    %420 = vmatprep.subr.mxu0 0.0
    %421 = vmatpush1.msra.mxu0 0.0
    %422 = vmatprep.subr.mxu0 0.0
    %423 = vmatpush1.msra.mxu0 0.0
    %424 = vmatprep.subr.mxu0 0.0
    %425 = vmatpush1.msra.mxu0 0.0
    %426 = vmatprep.subr.mxu0 0.0
    %427 = vmatpush1.msra.mxu0 0.0
    %428 = vmatprep.subr.mxu0 0.0
    %429 = vmatpush1.msra.mxu0 0.0
    %430 = vmatprep.subr.mxu0 0.0
    %431 = vmatpush1.msra.mxu0 0.0
    %432 = vmatprep.subr.mxu0 0.0
    %433 = vmatpush1.msra.mxu0 0.0
    %434 = vmatprep.mubr.f32.mxu0 0.0
    %435 = vmatmul.mubr.f32.gmra.mrb[0].mxu0 %v368
    %v436 = vpop.f32.mrb[0].mxu0
    %v437 = vadd.f32 %v365, %v436
    %v438 = vpop.f32.mrb[0].mxu0
    %439 = vdwg.mxu0
    %v441 = vlaneseq
    %v442 = vshrl.u32 %v441, 7
    %v443 = vsub.s32 0, %v442
    %v444 = vrot.slane %v107, %v443
    %v447 = vsel %vm120, %v357, 0
    %449 = vmatprep.subr.mxu0 0.0
    %450 = vmatpush1.msra.mxu0 %v103
    %451 = vmatprep.subr.mxu0 0.0
    %452 = vmatpush1.msra.mxu0 %v104
    %453 = vmatprep.subr.mxu0 0.0
    %454 = vmatpush1.msra.mxu0 %v105
    %455 = vmatprep.subr.mxu0 0.0
    %456 = vmatpush1.msra.mxu0 %v106
    %457 = vmatprep.subr.mxu0 0.0
    %458 = vmatpush1.msra.mxu0 0.0
    %459 = vmatprep.subr.mxu0 0.0
    %460 = vmatpush1.msra.mxu0 0.0
    %461 = vmatprep.subr.mxu0 0.0
    %462 = vmatpush1.msra.mxu0 0.0
    %463 = vmatprep.subr.mxu0 0.0
    %464 = vmatpush1.msra.mxu0 0.0
    %465 = vmatprep.subr.mxu0 0.0
    %466 = vmatpush1.msra.mxu0 0.0
    %467 = vmatprep.subr.mxu0 0.0
    %468 = vmatpush1.msra.mxu0 0.0
    %469 = vmatprep.subr.mxu0 0.0
    %470 = vmatpush1.msra.mxu0 0.0
    %471 = vmatprep.subr.mxu0 0.0
    %472 = vmatpush1.msra.mxu0 0.0
    %473 = vmatprep.subr.mxu0 0.0
    %474 = vmatpush1.msra.mxu0 0.0
    %475 = vmatprep.subr.mxu0 0.0
    %476 = vmatpush1.msra.mxu0 0.0
    %477 = vmatprep.subr.mxu0 0.0
    %478 = vmatpush1.msra.mxu0 0.0
    %479 = vmatprep.subr.mxu0 0.0
    %480 = vmatpush1.msra.mxu0 0.0
    %481 = vmatprep.subr.mxu0 0.0
    %482 = vmatpush1.msra.mxu0 0.0
    %483 = vmatprep.subr.mxu0 0.0
    %484 = vmatpush1.msra.mxu0 0.0
    %485 = vmatprep.subr.mxu0 0.0
    %486 = vmatpush1.msra.mxu0 0.0
    %487 = vmatprep.subr.mxu0 0.0
    %488 = vmatpush1.msra.mxu0 0.0
    %489 = vmatprep.subr.mxu0 0.0
    %490 = vmatpush1.msra.mxu0 0.0
    %491 = vmatprep.subr.mxu0 0.0
    %492 = vmatpush1.msra.mxu0 0.0
    %493 = vmatprep.subr.mxu0 0.0
    %494 = vmatpush1.msra.mxu0 0.0
    %495 = vmatprep.subr.mxu0 0.0
    %496 = vmatpush1.msra.mxu0 0.0
    %497 = vmatprep.subr.mxu0 0.0
    %498 = vmatpush1.msra.mxu0 0.0
    %499 = vmatprep.subr.mxu0 0.0
    %500 = vmatpush1.msra.mxu0 0.0
    %501 = vmatprep.subr.mxu0 0.0
    %502 = vmatpush1.msra.mxu0 0.0
    %503 = vmatprep.subr.mxu0 0.0
    %504 = vmatpush1.msra.mxu0 0.0
    %505 = vmatprep.subr.mxu0 0.0
    %506 = vmatpush1.msra.mxu0 0.0
    %507 = vmatprep.subr.mxu0 0.0
    %508 = vmatpush1.msra.mxu0 0.0
    %509 = vmatprep.subr.mxu0 0.0
    %510 = vmatpush1.msra.mxu0 0.0
    %511 = vmatprep.subr.mxu0 0.0
    %512 = vmatpush1.msra.mxu0 0.0
    %513 = vmatprep.mubr.f32.mxu0 0.0
    %514 = vmatmul.mubr.f32.gmra.mrb[0].mxu0 %v447
    %v515 = vpop.f32.mrb[0].mxu0
    %v516 = vadd.f32 %v444, %v515
    %v517 = vpop.f32.mrb[0].mxu0
    %518 = vdwg.mxu0
    %v520 = vsel %vm120, %v437, 0
    %522 = vmatprep.subr.mxu0 0.0
    %523 = vmatpush1.msra.mxu0 %v103
    %524 = vmatprep.subr.mxu0 0.0
    %525 = vmatpush1.msra.mxu0 %v104
    %526 = vmatprep.subr.mxu0 0.0
    %527 = vmatpush1.msra.mxu0 %v105
    %528 = vmatprep.subr.mxu0 0.0
    %529 = vmatpush1.msra.mxu0 %v106
    %530 = vmatprep.subr.mxu0 0.0
    %531 = vmatpush1.msra.mxu0 0.0
    %532 = vmatprep.subr.mxu0 0.0
    %533 = vmatpush1.msra.mxu0 0.0
    %534 = vmatprep.subr.mxu0 0.0
    %535 = vmatpush1.msra.mxu0 0.0
    %536 = vmatprep.subr.mxu0 0.0
    %537 = vmatpush1.msra.mxu0 0.0
    %538 = vmatprep.subr.mxu0 0.0
    %539 = vmatpush1.msra.mxu0 0.0
    %540 = vmatprep.subr.mxu0 0.0
    %541 = vmatpush1.msra.mxu0 0.0
    %542 = vmatprep.subr.mxu0 0.0
    %543 = vmatpush1.msra.mxu0 0.0
    %544 = vmatprep.subr.mxu0 0.0
    %545 = vmatpush1.msra.mxu0 0.0
    %546 = vmatprep.subr.mxu0 0.0
    %547 = vmatpush1.msra.mxu0 0.0
    %548 = vmatprep.subr.mxu0 0.0
    %549 = vmatpush1.msra.mxu0 0.0
    %550 = vmatprep.subr.mxu0 0.0
    %551 = vmatpush1.msra.mxu0 0.0
    %552 = vmatprep.subr.mxu0 0.0
    %553 = vmatpush1.msra.mxu0 0.0
    %554 = vmatprep.subr.mxu0 0.0
    %555 = vmatpush1.msra.mxu0 0.0
    %556 = vmatprep.subr.mxu0 0.0
    %557 = vmatpush1.msra.mxu0 0.0
    %558 = vmatprep.subr.mxu0 0.0
    %559 = vmatpush1.msra.mxu0 0.0
    %560 = vmatprep.subr.mxu0 0.0
    %561 = vmatpush1.msra.mxu0 0.0
    %562 = vmatprep.subr.mxu0 0.0
    %563 = vmatpush1.msra.mxu0 0.0
    %564 = vmatprep.subr.mxu0 0.0
    %565 = vmatpush1.msra.mxu0 0.0
    %566 = vmatprep.subr.mxu0 0.0
    %567 = vmatpush1.msra.mxu0 0.0
    %568 = vmatprep.subr.mxu0 0.0
    %569 = vmatpush1.msra.mxu0 0.0
    %570 = vmatprep.subr.mxu0 0.0
    %571 = vmatpush1.msra.mxu0 0.0
    %572 = vmatprep.subr.mxu0 0.0
    %573 = vmatpush1.msra.mxu0 0.0
    %574 = vmatprep.subr.mxu0 0.0
    %575 = vmatpush1.msra.mxu0 0.0
    %576 = vmatprep.subr.mxu0 0.0
    %577 = vmatpush1.msra.mxu0 0.0
    %578 = vmatprep.subr.mxu0 0.0
    %579 = vmatpush1.msra.mxu0 0.0
    %580 = vmatprep.subr.mxu0 0.0
    %581 = vmatpush1.msra.mxu0 0.0
    %582 = vmatprep.subr.mxu0 0.0
    %583 = vmatpush1.msra.mxu0 0.0
    %584 = vmatprep.subr.mxu0 0.0
    %585 = vmatpush1.msra.mxu0 0.0
    %586 = vmatprep.mubr.f32.mxu0 0.0
    %587 = vmatmul.mubr.f32.gmra.mrb[0].mxu0 %v520
    %v588 = vpop.f32.mrb[0].mxu0
    %v589 = vadd.f32 %v444, %v588
    %v590 = vpop.f32.mrb[0].mxu0
    %591 = vdwg.mxu0
    %593 = vrot.lane.b32.xlu0 %v191, 96
    %v594 = vpop.permute.xlu0 %593
    %v596 = vmul.f32 %v194, %v594
    %vm597 = vcmask 253952
    %v598 = vsel %vm597, %v596, 0.0
    %599 = vadd.xlane.f32.xlu0 %v598
    %v600 = vpop.xlane.xlu0 %599
    %v601 = vsub.f32 -inf, %v600
    %v602 = vmul.f32 %v601, 1.442695
    %v603 = vpow.pop %v602
    %v604 = vsub.f32 %v600, %v600
    %v605 = vmul.f32 %v604, 1.442695
    %v606 = vpow.pop %v605
    %v607 = vmul.f32 %v603, 0.0
    %v608 = vadd.f32 %v606, 0.0
    %v609 = vadd.f32 %v607, %v608
    %610 = vrot.lane.b32.xlu0 %v191, 64
    %v611 = vpop.permute.xlu0 %610
    %vm612 = vcmask 7168
    %v614 = vsel %vm612, %v606, 0
    %vm616 = vcmask 1040384
    %v617 = vsel %vm616, %v611, 0
    %619 = vmatprep.subr.mxu0 0.0
    %620 = vmatpush1.msra.mxu0 %v617
    %621 = vmatprep.subr.mxu0 0.0
    %622 = vmatpush1.msra.mxu0 0.0
    %623 = vmatprep.subr.mxu0 0.0
    %624 = vmatpush1.msra.mxu0 0.0
    %625 = vmatprep.subr.mxu0 0.0
    %626 = vmatpush1.msra.mxu0 0.0
    %627 = vmatprep.subr.mxu0 0.0
    %628 = vmatpush1.msra.mxu0 0.0
    %629 = vmatprep.subr.mxu0 0.0
    %630 = vmatpush1.msra.mxu0 0.0
    %631 = vmatprep.subr.mxu0 0.0
    %632 = vmatpush1.msra.mxu0 0.0
    %633 = vmatprep.subr.mxu0 0.0
    %634 = vmatpush1.msra.mxu0 0.0
    %635 = vmatprep.subr.mxu0 0.0
    %636 = vmatpush1.msra.mxu0 0.0
    %637 = vmatprep.subr.mxu0 0.0
    %638 = vmatpush1.msra.mxu0 0.0
    %639 = vmatprep.subr.mxu0 0.0
    %640 = vmatpush1.msra.mxu0 0.0
    %641 = vmatprep.subr.mxu0 0.0
    %642 = vmatpush1.msra.mxu0 0.0
    %643 = vmatprep.subr.mxu0 0.0
    %644 = vmatpush1.msra.mxu0 0.0
    %645 = vmatprep.subr.mxu0 0.0
    %646 = vmatpush1.msra.mxu0 0.0
    %647 = vmatprep.subr.mxu0 0.0
    %648 = vmatpush1.msra.mxu0 0.0
    %649 = vmatprep.subr.mxu0 0.0
    %650 = vmatpush1.msra.mxu0 0.0
    %651 = vmatprep.subr.mxu0 0.0
    %652 = vmatpush1.msra.mxu0 0.0
    %653 = vmatprep.subr.mxu0 0.0
    %654 = vmatpush1.msra.mxu0 0.0
    %655 = vmatprep.subr.mxu0 0.0
    %656 = vmatpush1.msra.mxu0 0.0
    %657 = vmatprep.subr.mxu0 0.0
    %658 = vmatpush1.msra.mxu0 0.0
    %659 = vmatprep.subr.mxu0 0.0
    %660 = vmatpush1.msra.mxu0 0.0
    %661 = vmatprep.subr.mxu0 0.0
    %662 = vmatpush1.msra.mxu0 0.0
    %663 = vmatprep.subr.mxu0 0.0
    %664 = vmatpush1.msra.mxu0 0.0
    %665 = vmatprep.subr.mxu0 0.0
    %666 = vmatpush1.msra.mxu0 0.0
    %667 = vmatprep.subr.mxu0 0.0
    %668 = vmatpush1.msra.mxu0 0.0
    %669 = vmatprep.subr.mxu0 0.0
    %670 = vmatpush1.msra.mxu0 0.0
    %671 = vmatprep.subr.mxu0 0.0
    %672 = vmatpush1.msra.mxu0 0.0
    %673 = vmatprep.subr.mxu0 0.0
    %674 = vmatpush1.msra.mxu0 0.0
    %675 = vmatprep.subr.mxu0 0.0
    %676 = vmatpush1.msra.mxu0 0.0
    %677 = vmatprep.subr.mxu0 0.0
    %678 = vmatpush1.msra.mxu0 0.0
    %679 = vmatprep.subr.mxu0 0.0
    %680 = vmatpush1.msra.mxu0 0.0
    %681 = vmatprep.subr.mxu0 0.0
    %682 = vmatpush1.msra.mxu0 0.0
    %683 = vmatprep.mubr.f32.mxu0 0.0
    %684 = vmatmul.mubr.f32.gmra.mrb[0].mxu0 %v614
    %v685 = vpop.f32.mrb[0].mxu0
    %v686 = vadd.f32 0.0, %v685
    %v687 = vpop.f32.mrb[0].mxu0
    %688 = vdwg.mxu0
    %v689 = vadd.f32 %v607, %v686
    %691 = vrot.lane.b32.xlu0 %v516, 96
    %v692 = vpop.permute.xlu0 %691
    %v694 = vsel %vm120, %v194, 0
    %v696 = vsel %vm120, %v692, 0
    %698 = vmatprep.subr.mxu0 0.0
    %699 = vmatpush1.xpose.msra.mxu0 %v696
    %700 = vmatprep.subr.mxu0 0.0
    %701 = vmatpush1.xpose.msra.mxu0 0.0
    %702 = vmatprep.subr.mxu0 0.0
    %703 = vmatpush1.xpose.msra.mxu0 0.0
    %704 = vmatprep.subr.mxu0 0.0
    %705 = vmatpush1.xpose.msra.mxu0 0.0
    %706 = vmatprep.subr.mxu0 0.0
    %707 = vmatpush1.xpose.msra.mxu0 0.0
    %708 = vmatprep.subr.mxu0 0.0
    %709 = vmatpush1.xpose.msra.mxu0 0.0
    %710 = vmatprep.subr.mxu0 0.0
    %711 = vmatpush1.xpose.msra.mxu0 0.0
    %712 = vmatprep.subr.mxu0 0.0
    %713 = vmatpush1.xpose.msra.mxu0 0.0
    %714 = vmatprep.subr.mxu0 0.0
    %715 = vmatpush1.xpose.msra.mxu0 0.0
    %716 = vmatprep.subr.mxu0 0.0
    %717 = vmatpush1.xpose.msra.mxu0 0.0
    %718 = vmatprep.subr.mxu0 0.0
    %719 = vmatpush1.xpose.msra.mxu0 0.0
    %720 = vmatprep.subr.mxu0 0.0
    %721 = vmatpush1.xpose.msra.mxu0 0.0
    %722 = vmatprep.subr.mxu0 0.0
    %723 = vmatpush1.xpose.msra.mxu0 0.0
    %724 = vmatprep.subr.mxu0 0.0
    %725 = vmatpush1.xpose.msra.mxu0 0.0
    %726 = vmatprep.subr.mxu0 0.0
    %727 = vmatpush1.xpose.msra.mxu0 0.0
    %728 = vmatprep.subr.mxu0 0.0
    %729 = vmatpush1.xpose.msra.mxu0 0.0
    %730 = vmatprep.subr.mxu0 0.0
    %731 = vmatpush1.xpose.msra.mxu0 0.0
    %732 = vmatprep.subr.mxu0 0.0
    %733 = vmatpush1.xpose.msra.mxu0 0.0
    %734 = vmatprep.subr.mxu0 0.0
    %735 = vmatpush1.xpose.msra.mxu0 0.0
    %736 = vmatprep.subr.mxu0 0.0
    %737 = vmatpush1.xpose.msra.mxu0 0.0
    %738 = vmatprep.subr.mxu0 0.0
    %739 = vmatpush1.xpose.msra.mxu0 0.0
    %740 = vmatprep.subr.mxu0 0.0
    %741 = vmatpush1.xpose.msra.mxu0 0.0
    %742 = vmatprep.subr.mxu0 0.0
    %743 = vmatpush1.xpose.msra.mxu0 0.0
    %744 = vmatprep.subr.mxu0 0.0
    %745 = vmatpush1.xpose.msra.mxu0 0.0
    %746 = vmatprep.subr.mxu0 0.0
    %747 = vmatpush1.xpose.msra.mxu0 0.0
    %748 = vmatprep.subr.mxu0 0.0
    %749 = vmatpush1.xpose.msra.mxu0 0.0
    %750 = vmatprep.subr.mxu0 0.0
    %751 = vmatpush1.xpose.msra.mxu0 0.0
    %752 = vmatprep.subr.mxu0 0.0
    %753 = vmatpush1.xpose.msra.mxu0 0.0
    %754 = vmatprep.subr.mxu0 0.0
    %755 = vmatpush1.xpose.msra.mxu0 0.0
    %756 = vmatprep.subr.mxu0 0.0
    %757 = vmatpush1.xpose.msra.mxu0 0.0
    %758 = vmatprep.subr.mxu0 0.0
    %759 = vmatpush1.xpose.msra.mxu0 0.0
    %760 = vmatprep.subr.mxu0 0.0
    %761 = vmatpush1.xpose.msra.mxu0 0.0
    %762 = vmatprep.mubr.f32.mxu0 0.0
    %763 = vmatmul.mubr.f32.gmra.mrb[0].mxu0 %v694
    %v764 = vpop.f32.mrb[0].mxu0
    %v765 = vadd.f32 0.0, %v764
    %v766 = vpop.f32.mrb[0].mxu0
    %767 = vdwg.mxu0
    %vm768 = vcmask 24576
    %v769 = vsel %vm768, %v765, -inf
    %770 = vmax.xlane.f32.xlu0 %v769
    %v771 = vpop.xlane.xlu0 %770
    %v772 = vmax.f32 %v600, %v771
    %v773 = vsub.f32 %v600, %v772
    %v774 = vmul.f32 %v773, 1.442695
    %v775 = vpow.pop %v774
    %v776 = vsub.f32 %v765, %v772
    %v777 = vmul.f32 %v776, 1.442695
    %v778 = vpow.pop %v777
    %v779 = vmul.f32 %v775, %v609
    %v780 = vsel %vm768, %v778, 0.0
    %781 = vadd.xlane.f32.xlu0 %v780
    %v782 = vpop.xlane.xlu0 %781
    %v783 = vadd.f32 %v779, %v782
    %v784 = vmul.f32 %v775, %v689
    %785 = vrot.lane.b32.xlu0 %v516, 64
    %v786 = vpop.permute.xlu0 %785
    %vm787 = vcmask 31744
    %v789 = vsel %vm787, %v778, 0
    %vm791 = vcmask 1043456
    %v792 = vsel %vm791, %v786, 0
    %794 = vmatprep.subr.mxu0 0.0
    %795 = vmatpush1.msra.mxu0 %v792
    %796 = vmatprep.subr.mxu0 0.0
    %797 = vmatpush1.msra.mxu0 0.0
    %798 = vmatprep.subr.mxu0 0.0
    %799 = vmatpush1.msra.mxu0 0.0
    %800 = vmatprep.subr.mxu0 0.0
    %801 = vmatpush1.msra.mxu0 0.0
    %802 = vmatprep.subr.mxu0 0.0
    %803 = vmatpush1.msra.mxu0 0.0
    %804 = vmatprep.subr.mxu0 0.0
    %805 = vmatpush1.msra.mxu0 0.0
    %806 = vmatprep.subr.mxu0 0.0
    %807 = vmatpush1.msra.mxu0 0.0
    %808 = vmatprep.subr.mxu0 0.0
    %809 = vmatpush1.msra.mxu0 0.0
    %810 = vmatprep.subr.mxu0 0.0
    %811 = vmatpush1.msra.mxu0 0.0
    %812 = vmatprep.subr.mxu0 0.0
    %813 = vmatpush1.msra.mxu0 0.0
    %814 = vmatprep.subr.mxu0 0.0
    %815 = vmatpush1.msra.mxu0 0.0
    %816 = vmatprep.subr.mxu0 0.0
    %817 = vmatpush1.msra.mxu0 0.0
    %818 = vmatprep.subr.mxu0 0.0
    %819 = vmatpush1.msra.mxu0 0.0
    %820 = vmatprep.subr.mxu0 0.0
    %821 = vmatpush1.msra.mxu0 0.0
    %822 = vmatprep.subr.mxu0 0.0
    %823 = vmatpush1.msra.mxu0 0.0
    %824 = vmatprep.subr.mxu0 0.0
    %825 = vmatpush1.msra.mxu0 0.0
    %826 = vmatprep.subr.mxu0 0.0
    %827 = vmatpush1.msra.mxu0 0.0
    %828 = vmatprep.subr.mxu0 0.0
    %829 = vmatpush1.msra.mxu0 0.0
    %830 = vmatprep.subr.mxu0 0.0
    %831 = vmatpush1.msra.mxu0 0.0
    %832 = vmatprep.subr.mxu0 0.0
    %833 = vmatpush1.msra.mxu0 0.0
    %834 = vmatprep.subr.mxu0 0.0
    %835 = vmatpush1.msra.mxu0 0.0
    %836 = vmatprep.subr.mxu0 0.0
    %837 = vmatpush1.msra.mxu0 0.0
    %838 = vmatprep.subr.mxu0 0.0
    %839 = vmatpush1.msra.mxu0 0.0
    %840 = vmatprep.subr.mxu0 0.0
    %841 = vmatpush1.msra.mxu0 0.0
    %842 = vmatprep.subr.mxu0 0.0
    %843 = vmatpush1.msra.mxu0 0.0
    %844 = vmatprep.subr.mxu0 0.0
    %845 = vmatpush1.msra.mxu0 0.0
    %846 = vmatprep.subr.mxu0 0.0
    %847 = vmatpush1.msra.mxu0 0.0
    %848 = vmatprep.subr.mxu0 0.0
    %849 = vmatpush1.msra.mxu0 0.0
    %850 = vmatprep.subr.mxu0 0.0
    %851 = vmatpush1.msra.mxu0 0.0
    %852 = vmatprep.subr.mxu0 0.0
    %853 = vmatpush1.msra.mxu0 0.0
    %854 = vmatprep.subr.mxu0 0.0
    %855 = vmatpush1.msra.mxu0 0.0
    %856 = vmatprep.subr.mxu0 0.0
    %857 = vmatpush1.msra.mxu0 0.0
    %858 = vmatprep.mubr.f32.mxu0 0.0
    %859 = vmatmul.mubr.f32.gmra.mrb[0].mxu0 %v789
    %v860 = vpop.f32.mrb[0].mxu0
    %v861 = vadd.f32 0.0, %v860
    %v862 = vpop.f32.mrb[0].mxu0
    %863 = vdwg.mxu0
    %v864 = vadd.f32 %v784, %v861
    %866 = vrot.lane.b32.xlu0 %v589, 96
    %v867 = vpop.permute.xlu0 %866
    %v868 = vsel %vm120, %v867, 0
    %870 = vmatprep.subr.mxu0 0.0
    %871 = vmatpush1.xpose.msra.mxu0 %v868
    %872 = vmatprep.subr.mxu0 0.0
    %873 = vmatpush1.xpose.msra.mxu0 0.0
    %874 = vmatprep.subr.mxu0 0.0
    %875 = vmatpush1.xpose.msra.mxu0 0.0
    %876 = vmatprep.subr.mxu0 0.0
    %877 = vmatpush1.xpose.msra.mxu0 0.0
    %878 = vmatprep.subr.mxu0 0.0
    %879 = vmatpush1.xpose.msra.mxu0 0.0
    %880 = vmatprep.subr.mxu0 0.0
    %881 = vmatpush1.xpose.msra.mxu0 0.0
    %882 = vmatprep.subr.mxu0 0.0
    %883 = vmatpush1.xpose.msra.mxu0 0.0
    %884 = vmatprep.subr.mxu0 0.0
    %885 = vmatpush1.xpose.msra.mxu0 0.0
    %886 = vmatprep.subr.mxu0 0.0
    %887 = vmatpush1.xpose.msra.mxu0 0.0
    %888 = vmatprep.subr.mxu0 0.0
    %889 = vmatpush1.xpose.msra.mxu0 0.0
    %890 = vmatprep.subr.mxu0 0.0
    %891 = vmatpush1.xpose.msra.mxu0 0.0
    %892 = vmatprep.subr.mxu0 0.0
    %893 = vmatpush1.xpose.msra.mxu0 0.0
    %894 = vmatprep.subr.mxu0 0.0
    %895 = vmatpush1.xpose.msra.mxu0 0.0
    %896 = vmatprep.subr.mxu0 0.0
    %897 = vmatpush1.xpose.msra.mxu0 0.0
    %898 = vmatprep.subr.mxu0 0.0
    %899 = vmatpush1.xpose.msra.mxu0 0.0
    %900 = vmatprep.subr.mxu0 0.0
    %901 = vmatpush1.xpose.msra.mxu0 0.0
    %902 = vmatprep.subr.mxu0 0.0
    %903 = vmatpush1.xpose.msra.mxu0 0.0
    %904 = vmatprep.subr.mxu0 0.0
    %905 = vmatpush1.xpose.msra.mxu0 0.0
    %906 = vmatprep.subr.mxu0 0.0
    %907 = vmatpush1.xpose.msra.mxu0 0.0
    %908 = vmatprep.subr.mxu0 0.0
    %909 = vmatpush1.xpose.msra.mxu0 0.0
    %910 = vmatprep.subr.mxu0 0.0
    %911 = vmatpush1.xpose.msra.mxu0 0.0
    %912 = vmatprep.subr.mxu0 0.0
    %913 = vmatpush1.xpose.msra.mxu0 0.0
    %914 = vmatprep.subr.mxu0 0.0
    %915 = vmatpush1.xpose.msra.mxu0 0.0
    %916 = vmatprep.subr.mxu0 0.0
    %917 = vmatpush1.xpose.msra.mxu0 0.0
    %918 = vmatprep.subr.mxu0 0.0
    %919 = vmatpush1.xpose.msra.mxu0 0.0
    %920 = vmatprep.subr.mxu0 0.0
    %921 = vmatpush1.xpose.msra.mxu0 0.0
    %922 = vmatprep.subr.mxu0 0.0
    %923 = vmatpush1.xpose.msra.mxu0 0.0
    %924 = vmatprep.subr.mxu0 0.0
    %925 = vmatpush1.xpose.msra.mxu0 0.0
    %926 = vmatprep.subr.mxu0 0.0
    %927 = vmatpush1.xpose.msra.mxu0 0.0
    %928 = vmatprep.subr.mxu0 0.0
    %929 = vmatpush1.xpose.msra.mxu0 0.0
    %930 = vmatprep.subr.mxu0 0.0
    %931 = vmatpush1.xpose.msra.mxu0 0.0
    %932 = vmatprep.subr.mxu0 0.0
    %933 = vmatpush1.xpose.msra.mxu0 0.0
    %934 = vmatprep.mubr.f32.mxu0 0.0
    %935 = vmatmul.mubr.f32.gmra.mrb[0].mxu0 %v694
    %v936 = vpop.f32.mrb[0].mxu0
    %v937 = vadd.f32 %v118, %v936
    %v938 = vpop.f32.mrb[0].mxu0
    %939 = vdwg.mxu0
    %vm940 = vcmask 57344
    %v941 = vsel %vm940, %v937, -inf
    %942 = vmax.xlane.f32.xlu0 %v941
    %v943 = vpop.xlane.xlu0 %942
    %v944 = vmax.f32 %v772, %v943
    %v945 = vsub.f32 %v772, %v944
    %v946 = vmul.f32 %v945, 1.442695
    %v947 = vpow.pop %v946
    %v948 = vsub.f32 %v937, %v944
    %v949 = vmul.f32 %v948, 1.442695
    %v950 = vpow.pop %v949
    %v951 = vmul.f32 %v947, %v783
    %v952 = vsel %vm940, %v950, 0.0
    %953 = vadd.xlane.f32.xlu0 %v952
    %v954 = vpop.xlane.xlu0 %953
    %v955 = vadd.f32 %v951, %v954
    %v956 = vmul.f32 %v947, %v864
    %957 = vrot.lane.b32.xlu0 %v589, 64
    %v958 = vpop.permute.xlu0 %957
    %vm960 = vcmask 64512
    %v962 = vsel %vm960, %v950, 0
    %964 = vmatprep.subr.mxu0 0.0
    %965 = vmatpush1.msra.mxu0 %v958
    %966 = vmatprep.subr.mxu0 0.0
    %967 = vmatpush1.msra.mxu0 0.0
    %968 = vmatprep.subr.mxu0 0.0
    %969 = vmatpush1.msra.mxu0 0.0
    %970 = vmatprep.subr.mxu0 0.0
    %971 = vmatpush1.msra.mxu0 0.0
    %972 = vmatprep.subr.mxu0 0.0
    %973 = vmatpush1.msra.mxu0 0.0
    %974 = vmatprep.subr.mxu0 0.0
    %975 = vmatpush1.msra.mxu0 0.0
    %976 = vmatprep.subr.mxu0 0.0
    %977 = vmatpush1.msra.mxu0 0.0
    %978 = vmatprep.subr.mxu0 0.0
    %979 = vmatpush1.msra.mxu0 0.0
    %980 = vmatprep.subr.mxu0 0.0
    %981 = vmatpush1.msra.mxu0 0.0
    %982 = vmatprep.subr.mxu0 0.0
    %983 = vmatpush1.msra.mxu0 0.0
    %984 = vmatprep.subr.mxu0 0.0
    %985 = vmatpush1.msra.mxu0 0.0
    %986 = vmatprep.subr.mxu0 0.0
    %987 = vmatpush1.msra.mxu0 0.0
    %988 = vmatprep.subr.mxu0 0.0
    %989 = vmatpush1.msra.mxu0 0.0
    %990 = vmatprep.subr.mxu0 0.0
    %991 = vmatpush1.msra.mxu0 0.0
    %992 = vmatprep.subr.mxu0 0.0
    %993 = vmatpush1.msra.mxu0 0.0
    %994 = vmatprep.subr.mxu0 0.0
    %995 = vmatpush1.msra.mxu0 0.0
    %996 = vmatprep.subr.mxu0 0.0
    %997 = vmatpush1.msra.mxu0 0.0
    %998 = vmatprep.subr.mxu0 0.0
    %999 = vmatpush1.msra.mxu0 0.0
    %1000 = vmatprep.subr.mxu0 0.0
    %1001 = vmatpush1.msra.mxu0 0.0
    %1002 = vmatprep.subr.mxu0 0.0
    %1003 = vmatpush1.msra.mxu0 0.0
    %1004 = vmatprep.subr.mxu0 0.0
    %1005 = vmatpush1.msra.mxu0 0.0
    %1006 = vmatprep.subr.mxu0 0.0
    %1007 = vmatpush1.msra.mxu0 0.0
    %1008 = vmatprep.subr.mxu0 0.0
    %1009 = vmatpush1.msra.mxu0 0.0
    %1010 = vmatprep.subr.mxu0 0.0
    %1011 = vmatpush1.msra.mxu0 0.0
    %1012 = vmatprep.subr.mxu0 0.0
    %1013 = vmatpush1.msra.mxu0 0.0
    %1014 = vmatprep.subr.mxu0 0.0
    %1015 = vmatpush1.msra.mxu0 0.0
    %1016 = vmatprep.subr.mxu0 0.0
    %1017 = vmatpush1.msra.mxu0 0.0
    %1018 = vmatprep.subr.mxu0 0.0
    %1019 = vmatpush1.msra.mxu0 0.0
    %1020 = vmatprep.subr.mxu0 0.0
    %1021 = vmatpush1.msra.mxu0 0.0
    %1022 = vmatprep.subr.mxu0 0.0
    %1023 = vmatpush1.msra.mxu0 0.0
    %1024 = vmatprep.subr.mxu0 0.0
    %1025 = vmatpush1.msra.mxu0 0.0
    %1026 = vmatprep.subr.mxu0 0.0
    %1027 = vmatpush1.msra.mxu0 0.0
    %1028 = vmatprep.mubr.f32.mxu0 0.0
    %1029 = vmatmul.mubr.f32.gmra.mrb[0].mxu0 %v962
    %v1030 = vpop.f32.mrb[0].mxu0
    %v1031 = vadd.f32 0.0, %v1030
    %v1032 = vpop.f32.mrb[0].mxu0
    %1033 = vdwg.mxu0
    %v1034 = vadd.f32 %v956, %v1031
    %v1035 = vrcp.pop %v955
    %v1036 = vmul.f32 %v1034, %v1035
    %v1038 = vsel %vm120, %v1036, 0
    %1040 = vmatprep.subr.mxu0 0.0
    %1041 = vmatpush1.msra.mxu0 %v108
    %1042 = vmatprep.subr.mxu0 0.0
    %1043 = vmatpush1.msra.mxu0 %v109
    %1044 = vmatprep.subr.mxu0 0.0
    %1045 = vmatpush1.msra.mxu0 %v110
    %1046 = vmatprep.subr.mxu0 0.0
    %1047 = vmatpush1.msra.mxu0 %v111
    %1048 = vmatprep.subr.mxu0 0.0
    %1049 = vmatpush1.msra.mxu0 0.0
    %1050 = vmatprep.subr.mxu0 0.0
    %1051 = vmatpush1.msra.mxu0 0.0
    %1052 = vmatprep.subr.mxu0 0.0
    %1053 = vmatpush1.msra.mxu0 0.0
    %1054 = vmatprep.subr.mxu0 0.0
    %1055 = vmatpush1.msra.mxu0 0.0
    %1056 = vmatprep.subr.mxu0 0.0
    %1057 = vmatpush1.msra.mxu0 0.0
    %1058 = vmatprep.subr.mxu0 0.0
    %1059 = vmatpush1.msra.mxu0 0.0
    %1060 = vmatprep.subr.mxu0 0.0
    %1061 = vmatpush1.msra.mxu0 0.0
    %1062 = vmatprep.subr.mxu0 0.0
    %1063 = vmatpush1.msra.mxu0 0.0
    %1064 = vmatprep.subr.mxu0 0.0
    %1065 = vmatpush1.msra.mxu0 0.0
    %1066 = vmatprep.subr.mxu0 0.0
    %1067 = vmatpush1.msra.mxu0 0.0
    %1068 = vmatprep.subr.mxu0 0.0
    %1069 = vmatpush1.msra.mxu0 0.0
    %1070 = vmatprep.subr.mxu0 0.0
    %1071 = vmatpush1.msra.mxu0 0.0
    %1072 = vmatprep.subr.mxu0 0.0
    %1073 = vmatpush1.msra.mxu0 0.0
    %1074 = vmatprep.subr.mxu0 0.0
    %1075 = vmatpush1.msra.mxu0 0.0
    %1076 = vmatprep.subr.mxu0 0.0
    %1077 = vmatpush1.msra.mxu0 0.0
    %1078 = vmatprep.subr.mxu0 0.0
    %1079 = vmatpush1.msra.mxu0 0.0
    %1080 = vmatprep.subr.mxu0 0.0
    %1081 = vmatpush1.msra.mxu0 0.0
    %1082 = vmatprep.subr.mxu0 0.0
    %1083 = vmatpush1.msra.mxu0 0.0
    %1084 = vmatprep.subr.mxu0 0.0
    %1085 = vmatpush1.msra.mxu0 0.0
    %1086 = vmatprep.subr.mxu0 0.0
    %1087 = vmatpush1.msra.mxu0 0.0
    %1088 = vmatprep.subr.mxu0 0.0
    %1089 = vmatpush1.msra.mxu0 0.0
    %1090 = vmatprep.subr.mxu0 0.0
    %1091 = vmatpush1.msra.mxu0 0.0
    %1092 = vmatprep.subr.mxu0 0.0
    %1093 = vmatpush1.msra.mxu0 0.0
    %1094 = vmatprep.subr.mxu0 0.0
    %1095 = vmatpush1.msra.mxu0 0.0
    %1096 = vmatprep.subr.mxu0 0.0
    %1097 = vmatpush1.msra.mxu0 0.0
    %1098 = vmatprep.subr.mxu0 0.0
    %1099 = vmatpush1.msra.mxu0 0.0
    %1100 = vmatprep.subr.mxu0 0.0
    %1101 = vmatpush1.msra.mxu0 0.0
    %1102 = vmatprep.subr.mxu0 0.0
    %1103 = vmatpush1.msra.mxu0 0.0
    %1104 = vmatprep.mubr.f32.mxu0 0.0
    %1105 = vmatmul.mubr.f32.gmra.mrb[0].mxu0 %v1038
    %v1106 = vpop.f32.mrb[0].mxu0
    %v1107 = vadd.f32 0.0, %v1106
    %v1108 = vpop.f32.mrb[0].mxu0
    %1109 = vdwg.mxu0
    %v1110 = vadd.f32 %v102, %v1107
    %v1111 = vadd.f32 %v1110, %v112
    %v1113 = vsel %vm120, %v1111, 0
    %1115 = vmatprep.subr.mxu0 0.0
    %1116 = vmatpush1.msra.mxu0 %v113
    %1117 = vmatprep.subr.mxu0 0.0
    %1118 = vmatpush1.msra.mxu0 %v114
    %1119 = vmatprep.subr.mxu0 0.0
    %1120 = vmatpush1.msra.mxu0 %v115
    %1121 = vmatprep.subr.mxu0 0.0
    %1122 = vmatpush1.msra.mxu0 %v116
    %1123 = vmatprep.subr.mxu0 0.0
    %1124 = vmatpush1.msra.mxu0 0.0
    %1125 = vmatprep.subr.mxu0 0.0
    %1126 = vmatpush1.msra.mxu0 0.0
    %1127 = vmatprep.subr.mxu0 0.0
    %1128 = vmatpush1.msra.mxu0 0.0
    %1129 = vmatprep.subr.mxu0 0.0
    %1130 = vmatpush1.msra.mxu0 0.0
    %1131 = vmatprep.subr.mxu0 0.0
    %1132 = vmatpush1.msra.mxu0 0.0
    %1133 = vmatprep.subr.mxu0 0.0
    %1134 = vmatpush1.msra.mxu0 0.0
    %1135 = vmatprep.subr.mxu0 0.0
    %1136 = vmatpush1.msra.mxu0 0.0
    %1137 = vmatprep.subr.mxu0 0.0
    %1138 = vmatpush1.msra.mxu0 0.0
    %1139 = vmatprep.subr.mxu0 0.0
    %1140 = vmatpush1.msra.mxu0 0.0
    %1141 = vmatprep.subr.mxu0 0.0
    %1142 = vmatpush1.msra.mxu0 0.0
    %1143 = vmatprep.subr.mxu0 0.0
    %1144 = vmatpush1.msra.mxu0 0.0
    %1145 = vmatprep.subr.mxu0 0.0
    %1146 = vmatpush1.msra.mxu0 0.0
    %1147 = vmatprep.subr.mxu0 0.0
    %1148 = vmatpush1.msra.mxu0 0.0
    %1149 = vmatprep.subr.mxu0 0.0
    %1150 = vmatpush1.msra.mxu0 0.0
    %1151 = vmatprep.subr.mxu0 0.0
    %1152 = vmatpush1.msra.mxu0 0.0
    %1153 = vmatprep.subr.mxu0 0.0
    %1154 = vmatpush1.msra.mxu0 0.0
    %1155 = vmatprep.subr.mxu0 0.0
    %1156 = vmatpush1.msra.mxu0 0.0
    %1157 = vmatprep.subr.mxu0 0.0
    %1158 = vmatpush1.msra.mxu0 0.0
    %1159 = vmatprep.subr.mxu0 0.0
    %1160 = vmatpush1.msra.mxu0 0.0
    %1161 = vmatprep.subr.mxu0 0.0
    %1162 = vmatpush1.msra.mxu0 0.0
    %1163 = vmatprep.subr.mxu0 0.0
    %1164 = vmatpush1.msra.mxu0 0.0
    %1165 = vmatprep.subr.mxu0 0.0
    %1166 = vmatpush1.msra.mxu0 0.0
    %1167 = vmatprep.subr.mxu0 0.0
    %1168 = vmatpush1.msra.mxu0 0.0
    %1169 = vmatprep.subr.mxu0 0.0
    %1170 = vmatpush1.msra.mxu0 0.0
    %1171 = vmatprep.subr.mxu0 0.0
    %1172 = vmatpush1.msra.mxu0 0.0
    %1173 = vmatprep.subr.mxu0 0.0
    %1174 = vmatpush1.msra.mxu0 0.0
    %1175 = vmatprep.subr.mxu0 0.0
    %1176 = vmatpush1.msra.mxu0 0.0
    %1177 = vmatprep.subr.mxu0 0.0
    %1178 = vmatpush1.msra.mxu0 0.0
    %1179 = vmatprep.mubr.f32.mxu0 0.0
    %1180 = vmatmul.mubr.f32.gmra.mrb[0].mxu0 %v1113
    %v1181 = vpop.f32.mrb[0].mxu0
    %v1182 = vadd.f32 %v117, %v1181
    %v1183 = vpop.f32.mrb[0].mxu0
    %1184 = vdwg.mxu0
    %v1185 = vsel %vm616, %v1182, -inf
    %1186 = vmax.xlane.f32.xlu0 %v1185
    %v1187 = vpop.xlane.xlu0 %1186
    %v1188 = vsub.f32 %v1182, %v1187
    %v1189 = vmul.f32 %v1188, 1.442695
    %v1190 = vpow.pop %v1189
    %v1191 = vsel %vm616, %v1190, 0.0
    %1192 = vadd.xlane.f32.xlu0 %v1191
    %v1193 = vpop.xlane.xlu0 %1192
    %v1194 = vlog2.pop %v1193
    %v1195 = vmul.f32 %v1194, 0.6931472
    %v1196 = vadd.f32 %v1187, %v1195
    %1197 = vset.pattern.permute.xlu0 0
    %1198 = vperm.xlu0 %1197, %v119
    %v1199 = vpop.permute.xlu0 %1198
    %vm1200 = vcmp.eq.s32.totalorder %v196, %v1199
    %v1201 = vsel %vm1200, 1, 0
    %v1202 = vcvt.s32.f32 %v1201
    %v1203 = vmul.f32 %v1182, %v1202
    %v1204 = vsel %vm616, %v1203, 0.0
    %1205 = vadd.xlane.f32.xlu0 %v1204
    %v1206 = vpop.xlane.xlu0 %1205
    %vm1207 = vcmp.ne.s32.totalorder %v119, 4294967196
    %v1208 = vsel %vm1207, 1, 0
    %v1209 = vcvt.s32.f32 %v1208
    %v1210 = vsub.f32 %v1196, %v1206
    %v1211 = vmul.f32 %v1210, %v1209
    %v1212 = vadd.f32 %v1211, 0.0
    %v1213 = vadd.f32 %v1209, 0.0
    %vm1214 = vcmp.ge.f32.partialorder %v1182, %v1187
    %v1215 = vsel %vm1214, %v197, 128.0
    %v1216 = vsel %vm616, %v1215, inf
    %1217 = vmin.xlane.f32.xlu0 %v1216
    %v1218 = vpop.xlane.xlu0 %1217
    %v1219 = vcvt.f32.s32.to.zero.pseudo %v1218
    %vm1220 = vcmp.eq.s32.totalorder %v196, 0
    %v1221 = vsel %vm1220, 1, 0
    %v1222 = vmul.u32 %v1219, %v1221
    %s1223 = scalar_lea.vmem %s0, 8
    %v1224 = vld [vmem:[%s1223] sm:$0xff]
    %v1226 = vcombine.high %v1224, %v1224
    %v1227 = vsel %vm207, %v1226, 0
    %1229 = vmatprep.subr.mxu0 0.0
    %1230 = vmatpush1.msra.mxu0 %v61
    %1231 = vmatprep.subr.mxu0 0.0
    %1232 = vmatpush1.msra.mxu0 %v62
    %1233 = vmatprep.subr.mxu0 0.0
    %1234 = vmatpush1.msra.mxu0 %v63
    %1235 = vmatprep.subr.mxu0 0.0
    %1236 = vmatpush1.msra.mxu0 %v64
    %1237 = vmatprep.subr.mxu0 0.0
    %1238 = vmatpush1.msra.mxu0 %v65
    %1239 = vmatprep.subr.mxu0 0.0
    %1240 = vmatpush1.msra.mxu0 %v66
    %1241 = vmatprep.subr.mxu0 0.0
    %1242 = vmatpush1.msra.mxu0 %v67
    %1243 = vmatprep.subr.mxu0 0.0
    %1244 = vmatpush1.msra.mxu0 %v68
    %1245 = vmatprep.subr.mxu0 0.0
    %1246 = vmatpush1.msra.mxu0 %v69
    %1247 = vmatprep.subr.mxu0 0.0
    %1248 = vmatpush1.msra.mxu0 %v70
    %1249 = vmatprep.subr.mxu0 0.0
    %1250 = vmatpush1.msra.mxu0 %v71
    %1251 = vmatprep.subr.mxu0 0.0
    %1252 = vmatpush1.msra.mxu0 %v72
    %1253 = vmatprep.subr.mxu0 0.0
    %1254 = vmatpush1.msra.mxu0 %v73
    %1255 = vmatprep.subr.mxu0 0.0
    %1256 = vmatpush1.msra.mxu0 %v74
    %1257 = vmatprep.subr.mxu0 0.0
    %1258 = vmatpush1.msra.mxu0 %v75
    %1259 = vmatprep.subr.mxu0 0.0
    %1260 = vmatpush1.msra.mxu0 %v76
    %1261 = vmatprep.subr.mxu0 0.0
    %1262 = vmatpush1.msra.mxu0 %v77
    %1263 = vmatprep.subr.mxu0 0.0
    %1264 = vmatpush1.msra.mxu0 %v78
    %1265 = vmatprep.subr.mxu0 0.0
    %1266 = vmatpush1.msra.mxu0 %v79
    %1267 = vmatprep.subr.mxu0 0.0
    %1268 = vmatpush1.msra.mxu0 %v80
    %1269 = vmatprep.subr.mxu0 0.0
    %1270 = vmatpush1.msra.mxu0 %v81
    %1271 = vmatprep.subr.mxu0 0.0
    %1272 = vmatpush1.msra.mxu0 %v82
    %1273 = vmatprep.subr.mxu0 0.0
    %1274 = vmatpush1.msra.mxu0 %v83
    %1275 = vmatprep.subr.mxu0 0.0
    %1276 = vmatpush1.msra.mxu0 %v84
    %1277 = vmatprep.subr.mxu0 0.0
    %1278 = vmatpush1.msra.mxu0 0.0
    %1279 = vmatprep.subr.mxu0 0.0
    %1280 = vmatpush1.msra.mxu0 0.0
    %1281 = vmatprep.subr.mxu0 0.0
    %1282 = vmatpush1.msra.mxu0 0.0
    %1283 = vmatprep.subr.mxu0 0.0
    %1284 = vmatpush1.msra.mxu0 0.0
    %1285 = vmatprep.subr.mxu0 0.0
    %1286 = vmatpush1.msra.mxu0 0.0
    %1287 = vmatprep.subr.mxu0 0.0
    %1288 = vmatpush1.msra.mxu0 0.0
    %1289 = vmatprep.subr.mxu0 0.0
    %1290 = vmatpush1.msra.mxu0 0.0
    %1291 = vmatprep.subr.mxu0 0.0
    %1292 = vmatpush1.msra.mxu0 0.0
    %1293 = vmatprep.mubr.f32.mxu0 %v1227
    %1294 = vmatmul.mubr.f32.gmra.mrb[0].mxu0 %v1224
    %v1295 = vpop.f32.mrb[0].mxu0
    %v1296 = vadd.f32 %v203, %v1295
    %v1297 = vpop.f32.mrb[0].mxu0
    %1298 = vdwg.mxu0
    %v1300 = vsel %vm286, %v1296, 0
    %1302 = vmatprep.subr.mxu0 0.0
    %1303 = vmatpush1.msra.mxu0 %v86
    %1304 = vmatprep.subr.mxu0 0.0
    %1305 = vmatpush1.msra.mxu0 %v87
    %1306 = vmatprep.subr.mxu0 0.0
    %1307 = vmatpush1.msra.mxu0 %v88
    %1308 = vmatprep.subr.mxu0 0.0
    %1309 = vmatpush1.msra.mxu0 %v89
    %1310 = vmatprep.subr.mxu0 0.0
    %1311 = vmatpush1.msra.mxu0 %v90
    %1312 = vmatprep.subr.mxu0 0.0
    %1313 = vmatpush1.msra.mxu0 %v91
    %1314 = vmatprep.subr.mxu0 0.0
    %1315 = vmatpush1.msra.mxu0 0.0
    %1316 = vmatprep.subr.mxu0 0.0
    %1317 = vmatpush1.msra.mxu0 0.0
    %1318 = vmatprep.subr.mxu0 0.0
    %1319 = vmatpush1.msra.mxu0 0.0
    %1320 = vmatprep.subr.mxu0 0.0
    %1321 = vmatpush1.msra.mxu0 0.0
    %1322 = vmatprep.subr.mxu0 0.0
    %1323 = vmatpush1.msra.mxu0 0.0
    %1324 = vmatprep.subr.mxu0 0.0
    %1325 = vmatpush1.msra.mxu0 0.0
    %1326 = vmatprep.subr.mxu0 0.0
    %1327 = vmatpush1.msra.mxu0 0.0
    %1328 = vmatprep.subr.mxu0 0.0
    %1329 = vmatpush1.msra.mxu0 0.0
    %1330 = vmatprep.subr.mxu0 0.0
    %1331 = vmatpush1.msra.mxu0 0.0
    %1332 = vmatprep.subr.mxu0 0.0
    %1333 = vmatpush1.msra.mxu0 0.0
    %1334 = vmatprep.subr.mxu0 0.0
    %1335 = vmatpush1.msra.mxu0 0.0
    %1336 = vmatprep.subr.mxu0 0.0
    %1337 = vmatpush1.msra.mxu0 0.0
    %1338 = vmatprep.subr.mxu0 0.0
    %1339 = vmatpush1.msra.mxu0 0.0
    %1340 = vmatprep.subr.mxu0 0.0
    %1341 = vmatpush1.msra.mxu0 0.0
    %1342 = vmatprep.subr.mxu0 0.0
    %1343 = vmatpush1.msra.mxu0 0.0
    %1344 = vmatprep.subr.mxu0 0.0
    %1345 = vmatpush1.msra.mxu0 0.0
    %1346 = vmatprep.subr.mxu0 0.0
    %1347 = vmatpush1.msra.mxu0 0.0
    %1348 = vmatprep.subr.mxu0 0.0
    %1349 = vmatpush1.msra.mxu0 0.0
    %1350 = vmatprep.subr.mxu0 0.0
    %1351 = vmatpush1.msra.mxu0 0.0
    %1352 = vmatprep.subr.mxu0 0.0
    %1353 = vmatpush1.msra.mxu0 0.0
    %1354 = vmatprep.subr.mxu0 0.0
    %1355 = vmatpush1.msra.mxu0 0.0
    %1356 = vmatprep.subr.mxu0 0.0
    %1357 = vmatpush1.msra.mxu0 0.0
    %1358 = vmatprep.subr.mxu0 0.0
    %1359 = vmatpush1.msra.mxu0 0.0
    %1360 = vmatprep.subr.mxu0 0.0
    %1361 = vmatpush1.msra.mxu0 0.0
    %1362 = vmatprep.subr.mxu0 0.0
    %1363 = vmatpush1.msra.mxu0 0.0
    %1364 = vmatprep.subr.mxu0 0.0
    %1365 = vmatpush1.msra.mxu0 0.0
    %1366 = vmatprep.mubr.f32.mxu0 0.0
    %1367 = vmatmul.mubr.f32.gmra.mrb[0].mxu0 %v1300
    %v1368 = vpop.f32.mrb[0].mxu0
    %v1369 = vadd.f32 %v284, %v1368
    %v1370 = vpop.f32.mrb[0].mxu0
    %1371 = vdwg.mxu0
    %s1372 = scalar_lea.vmem %s1, 8
    %v1373 = vld [vmem:[%s1372] sm:$0xff]
    %v1375 = vsel %vm207, %v1373, 0
    %1377 = vmatprep.subr.mxu0 0.0
    %1378 = vmatpush1.msra.mxu0 %v93
    %1379 = vmatprep.subr.mxu0 0.0
    %1380 = vmatpush1.msra.mxu0 %v94
    %1381 = vmatprep.subr.mxu0 0.0
    %1382 = vmatpush1.msra.mxu0 %v95
    %1383 = vmatprep.subr.mxu0 0.0
    %1384 = vmatpush1.msra.mxu0 %v96
    %1385 = vmatprep.subr.mxu0 0.0
    %1386 = vmatpush1.msra.mxu0 %v97
    %1387 = vmatprep.subr.mxu0 0.0
    %1388 = vmatpush1.msra.mxu0 %v98
    %1389 = vmatprep.subr.mxu0 0.0
    %1390 = vmatpush1.msra.mxu0 %v99
    %1391 = vmatprep.subr.mxu0 0.0
    %1392 = vmatpush1.msra.mxu0 %v100
    %1393 = vmatprep.subr.mxu0 0.0
    %1394 = vmatpush1.msra.mxu0 0.0
    %1395 = vmatprep.subr.mxu0 0.0
    %1396 = vmatpush1.msra.mxu0 0.0
    %1397 = vmatprep.subr.mxu0 0.0
    %1398 = vmatpush1.msra.mxu0 0.0
    %1399 = vmatprep.subr.mxu0 0.0
    %1400 = vmatpush1.msra.mxu0 0.0
    %1401 = vmatprep.subr.mxu0 0.0
    %1402 = vmatpush1.msra.mxu0 0.0
    %1403 = vmatprep.subr.mxu0 0.0
    %1404 = vmatpush1.msra.mxu0 0.0
    %1405 = vmatprep.subr.mxu0 0.0
    %1406 = vmatpush1.msra.mxu0 0.0
    %1407 = vmatprep.subr.mxu0 0.0
    %1408 = vmatpush1.msra.mxu0 0.0
    %1409 = vmatprep.subr.mxu0 0.0
    %1410 = vmatpush1.msra.mxu0 0.0
    %1411 = vmatprep.subr.mxu0 0.0
    %1412 = vmatpush1.msra.mxu0 0.0
    %1413 = vmatprep.subr.mxu0 0.0
    %1414 = vmatpush1.msra.mxu0 0.0
    %1415 = vmatprep.subr.mxu0 0.0
    %1416 = vmatpush1.msra.mxu0 0.0
    %1417 = vmatprep.subr.mxu0 0.0
    %1418 = vmatpush1.msra.mxu0 0.0
    %1419 = vmatprep.subr.mxu0 0.0
    %1420 = vmatpush1.msra.mxu0 0.0
    %1421 = vmatprep.subr.mxu0 0.0
    %1422 = vmatpush1.msra.mxu0 0.0
    %1423 = vmatprep.subr.mxu0 0.0
    %1424 = vmatpush1.msra.mxu0 0.0
    %1425 = vmatprep.subr.mxu0 0.0
    %1426 = vmatpush1.msra.mxu0 0.0
    %1427 = vmatprep.subr.mxu0 0.0
    %1428 = vmatpush1.msra.mxu0 0.0
    %1429 = vmatprep.subr.mxu0 0.0
    %1430 = vmatpush1.msra.mxu0 0.0
    %1431 = vmatprep.subr.mxu0 0.0
    %1432 = vmatpush1.msra.mxu0 0.0
    %1433 = vmatprep.subr.mxu0 0.0
    %1434 = vmatpush1.msra.mxu0 0.0
    %1435 = vmatprep.subr.mxu0 0.0
    %1436 = vmatpush1.msra.mxu0 0.0
    %1437 = vmatprep.subr.mxu0 0.0
    %1438 = vmatpush1.msra.mxu0 0.0
    %1439 = vmatprep.subr.mxu0 0.0
    %1440 = vmatpush1.msra.mxu0 0.0
    %1441 = vmatprep.mubr.f32.mxu0 0.0
    %1442 = vmatmul.mubr.f32.gmra.mrb[0].mxu0 %v1375
    %v1443 = vpop.f32.mrb[0].mxu0
    %v1444 = vadd.f32 %v365, %v1443
    %v1445 = vpop.f32.mrb[0].mxu0
    %1446 = vdwg.mxu0
    %v1448 = vsel %vm120, %v1369, 0
    %1450 = vmatprep.subr.mxu0 0.0
    %1451 = vmatpush1.msra.mxu0 %v103
    %1452 = vmatprep.subr.mxu0 0.0
    %1453 = vmatpush1.msra.mxu0 %v104
    %1454 = vmatprep.subr.mxu0 0.0
    %1455 = vmatpush1.msra.mxu0 %v105
    %1456 = vmatprep.subr.mxu0 0.0
    %1457 = vmatpush1.msra.mxu0 %v106
    %1458 = vmatprep.subr.mxu0 0.0
    %1459 = vmatpush1.msra.mxu0 0.0
    %1460 = vmatprep.subr.mxu0 0.0
    %1461 = vmatpush1.msra.mxu0 0.0
    %1462 = vmatprep.subr.mxu0 0.0
    %1463 = vmatpush1.msra.mxu0 0.0
    %1464 = vmatprep.subr.mxu0 0.0
    %1465 = vmatpush1.msra.mxu0 0.0
    %1466 = vmatprep.subr.mxu0 0.0
    %1467 = vmatpush1.msra.mxu0 0.0
    %1468 = vmatprep.subr.mxu0 0.0
    %1469 = vmatpush1.msra.mxu0 0.0
    %1470 = vmatprep.subr.mxu0 0.0
    %1471 = vmatpush1.msra.mxu0 0.0
    %1472 = vmatprep.subr.mxu0 0.0
    %1473 = vmatpush1.msra.mxu0 0.0
    %1474 = vmatprep.subr.mxu0 0.0
    %1475 = vmatpush1.msra.mxu0 0.0
    %1476 = vmatprep.subr.mxu0 0.0
    %1477 = vmatpush1.msra.mxu0 0.0
    %1478 = vmatprep.subr.mxu0 0.0
    %1479 = vmatpush1.msra.mxu0 0.0
    %1480 = vmatprep.subr.mxu0 0.0
    %1481 = vmatpush1.msra.mxu0 0.0
    %1482 = vmatprep.subr.mxu0 0.0
    %1483 = vmatpush1.msra.mxu0 0.0
    %1484 = vmatprep.subr.mxu0 0.0
    %1485 = vmatpush1.msra.mxu0 0.0
    %1486 = vmatprep.subr.mxu0 0.0
    %1487 = vmatpush1.msra.mxu0 0.0
    %1488 = vmatprep.subr.mxu0 0.0
    %1489 = vmatpush1.msra.mxu0 0.0
    %1490 = vmatprep.subr.mxu0 0.0
    %1491 = vmatpush1.msra.mxu0 0.0
    %1492 = vmatprep.subr.mxu0 0.0
    %1493 = vmatpush1.msra.mxu0 0.0
    %1494 = vmatprep.subr.mxu0 0.0
    %1495 = vmatpush1.msra.mxu0 0.0
    %1496 = vmatprep.subr.mxu0 0.0
    %1497 = vmatpush1.msra.mxu0 0.0
    %1498 = vmatprep.subr.mxu0 0.0
    %1499 = vmatpush1.msra.mxu0 0.0
    %1500 = vmatprep.subr.mxu0 0.0
    %1501 = vmatpush1.msra.mxu0 0.0
    %1502 = vmatprep.subr.mxu0 0.0
    %1503 = vmatpush1.msra.mxu0 0.0
    %1504 = vmatprep.subr.mxu0 0.0
    %1505 = vmatpush1.msra.mxu0 0.0
    %1506 = vmatprep.subr.mxu0 0.0
    %1507 = vmatpush1.msra.mxu0 0.0
    %1508 = vmatprep.subr.mxu0 0.0
    %1509 = vmatpush1.msra.mxu0 0.0
    %1510 = vmatprep.subr.mxu0 0.0
    %1511 = vmatpush1.msra.mxu0 0.0
    %1512 = vmatprep.subr.mxu0 0.0
    %1513 = vmatpush1.msra.mxu0 0.0
    %1514 = vmatprep.mubr.f32.mxu0 0.0
    %1515 = vmatmul.mubr.f32.gmra.mrb[0].mxu0 %v1448
    %v1516 = vpop.f32.mrb[0].mxu0
    %v1517 = vadd.f32 %v444, %v1516
    %v1518 = vpop.f32.mrb[0].mxu0
    %1519 = vdwg.mxu0
    %v1521 = vsel %vm120, %v1444, 0
    %1523 = vmatprep.subr.mxu0 0.0
    %1524 = vmatpush1.msra.mxu0 %v103
    %1525 = vmatprep.subr.mxu0 0.0
    %1526 = vmatpush1.msra.mxu0 %v104
    %1527 = vmatprep.subr.mxu0 0.0
    %1528 = vmatpush1.msra.mxu0 %v105
    %1529 = vmatprep.subr.mxu0 0.0
    %1530 = vmatpush1.msra.mxu0 %v106
    %1531 = vmatprep.subr.mxu0 0.0
    %1532 = vmatpush1.msra.mxu0 0.0
    %1533 = vmatprep.subr.mxu0 0.0
    %1534 = vmatpush1.msra.mxu0 0.0
    %1535 = vmatprep.subr.mxu0 0.0
    %1536 = vmatpush1.msra.mxu0 0.0
    %1537 = vmatprep.subr.mxu0 0.0
    %1538 = vmatpush1.msra.mxu0 0.0
    %1539 = vmatprep.subr.mxu0 0.0
    %1540 = vmatpush1.msra.mxu0 0.0
    %1541 = vmatprep.subr.mxu0 0.0
    %1542 = vmatpush1.msra.mxu0 0.0
    %1543 = vmatprep.subr.mxu0 0.0
    %1544 = vmatpush1.msra.mxu0 0.0
    %1545 = vmatprep.subr.mxu0 0.0
    %1546 = vmatpush1.msra.mxu0 0.0
    %1547 = vmatprep.subr.mxu0 0.0
    %1548 = vmatpush1.msra.mxu0 0.0
    %1549 = vmatprep.subr.mxu0 0.0
    %1550 = vmatpush1.msra.mxu0 0.0
    %1551 = vmatprep.subr.mxu0 0.0
    %1552 = vmatpush1.msra.mxu0 0.0
    %1553 = vmatprep.subr.mxu0 0.0
    %1554 = vmatpush1.msra.mxu0 0.0
    %1555 = vmatprep.subr.mxu0 0.0
    %1556 = vmatpush1.msra.mxu0 0.0
    %1557 = vmatprep.subr.mxu0 0.0
    %1558 = vmatpush1.msra.mxu0 0.0
    %1559 = vmatprep.subr.mxu0 0.0
    %1560 = vmatpush1.msra.mxu0 0.0
    %1561 = vmatprep.subr.mxu0 0.0
    %1562 = vmatpush1.msra.mxu0 0.0
    %1563 = vmatprep.subr.mxu0 0.0
    %1564 = vmatpush1.msra.mxu0 0.0
    %1565 = vmatprep.subr.mxu0 0.0
    %1566 = vmatpush1.msra.mxu0 0.0
    %1567 = vmatprep.subr.mxu0 0.0
    %1568 = vmatpush1.msra.mxu0 0.0
    %1569 = vmatprep.subr.mxu0 0.0
    %1570 = vmatpush1.msra.mxu0 0.0
    %1571 = vmatprep.subr.mxu0 0.0
    %1572 = vmatpush1.msra.mxu0 0.0
    %1573 = vmatprep.subr.mxu0 0.0
    %1574 = vmatpush1.msra.mxu0 0.0
    %1575 = vmatprep.subr.mxu0 0.0
    %1576 = vmatpush1.msra.mxu0 0.0
    %1577 = vmatprep.subr.mxu0 0.0
    %1578 = vmatpush1.msra.mxu0 0.0
    %1579 = vmatprep.subr.mxu0 0.0
    %1580 = vmatpush1.msra.mxu0 0.0
    %1581 = vmatprep.subr.mxu0 0.0
    %1582 = vmatpush1.msra.mxu0 0.0
    %1583 = vmatprep.subr.mxu0 0.0
    %1584 = vmatpush1.msra.mxu0 0.0
    %1585 = vmatprep.subr.mxu0 0.0
    %1586 = vmatpush1.msra.mxu0 0.0
    %1587 = vmatprep.mubr.f32.mxu0 0.0
    %1588 = vmatmul.mubr.f32.gmra.mrb[0].mxu0 %v1521
    %v1589 = vpop.f32.mrb[0].mxu0
    %v1590 = vadd.f32 %v444, %v1589
    %v1591 = vpop.f32.mrb[0].mxu0
    %1592 = vdwg.mxu0
    %1594 = vrot.lane.b32.xlu0 %v1517, 96
    %v1595 = vpop.permute.xlu0 %1594
    %v1596 = vsel %vm120, %v1595, 0
    %1598 = vmatprep.subr.mxu0 0.0
    %1599 = vmatpush1.xpose.msra.mxu0 %v1596
    %1600 = vmatprep.subr.mxu0 0.0
    %1601 = vmatpush1.xpose.msra.mxu0 0.0
    %1602 = vmatprep.subr.mxu0 0.0
    %1603 = vmatpush1.xpose.msra.mxu0 0.0
    %1604 = vmatprep.subr.mxu0 0.0
    %1605 = vmatpush1.xpose.msra.mxu0 0.0
    %1606 = vmatprep.subr.mxu0 0.0
    %1607 = vmatpush1.xpose.msra.mxu0 0.0
    %1608 = vmatprep.subr.mxu0 0.0
    %1609 = vmatpush1.xpose.msra.mxu0 0.0
    %1610 = vmatprep.subr.mxu0 0.0
    %1611 = vmatpush1.xpose.msra.mxu0 0.0
    %1612 = vmatprep.subr.mxu0 0.0
    %1613 = vmatpush1.xpose.msra.mxu0 0.0
    %1614 = vmatprep.subr.mxu0 0.0
    %1615 = vmatpush1.xpose.msra.mxu0 0.0
    %1616 = vmatprep.subr.mxu0 0.0
    %1617 = vmatpush1.xpose.msra.mxu0 0.0
    %1618 = vmatprep.subr.mxu0 0.0
    %1619 = vmatpush1.xpose.msra.mxu0 0.0
    %1620 = vmatprep.subr.mxu0 0.0
    %1621 = vmatpush1.xpose.msra.mxu0 0.0
    %1622 = vmatprep.subr.mxu0 0.0
    %1623 = vmatpush1.xpose.msra.mxu0 0.0
    %1624 = vmatprep.subr.mxu0 0.0
    %1625 = vmatpush1.xpose.msra.mxu0 0.0
    %1626 = vmatprep.subr.mxu0 0.0
    %1627 = vmatpush1.xpose.msra.mxu0 0.0
    %1628 = vmatprep.subr.mxu0 0.0
    %1629 = vmatpush1.xpose.msra.mxu0 0.0
    %1630 = vmatprep.subr.mxu0 0.0
    %1631 = vmatpush1.xpose.msra.mxu0 0.0
    %1632 = vmatprep.subr.mxu0 0.0
    %1633 = vmatpush1.xpose.msra.mxu0 0.0
    %1634 = vmatprep.subr.mxu0 0.0
    %1635 = vmatpush1.xpose.msra.mxu0 0.0
    %1636 = vmatprep.subr.mxu0 0.0
    %1637 = vmatpush1.xpose.msra.mxu0 0.0
    %1638 = vmatprep.subr.mxu0 0.0
    %1639 = vmatpush1.xpose.msra.mxu0 0.0
    %1640 = vmatprep.subr.mxu0 0.0
    %1641 = vmatpush1.xpose.msra.mxu0 0.0
    %1642 = vmatprep.subr.mxu0 0.0
    %1643 = vmatpush1.xpose.msra.mxu0 0.0
    %1644 = vmatprep.subr.mxu0 0.0
    %1645 = vmatpush1.xpose.msra.mxu0 0.0
    %1646 = vmatprep.subr.mxu0 0.0
    %1647 = vmatpush1.xpose.msra.mxu0 0.0
    %1648 = vmatprep.subr.mxu0 0.0
    %1649 = vmatpush1.xpose.msra.mxu0 0.0
    %1650 = vmatprep.subr.mxu0 0.0
    %1651 = vmatpush1.xpose.msra.mxu0 0.0
    %1652 = vmatprep.subr.mxu0 0.0
    %1653 = vmatpush1.xpose.msra.mxu0 0.0
    %1654 = vmatprep.subr.mxu0 0.0
    %1655 = vmatpush1.xpose.msra.mxu0 0.0
    %1656 = vmatprep.subr.mxu0 0.0
    %1657 = vmatpush1.xpose.msra.mxu0 0.0
    %1658 = vmatprep.subr.mxu0 0.0
    %1659 = vmatpush1.xpose.msra.mxu0 0.0
    %1660 = vmatprep.subr.mxu0 0.0
    %1661 = vmatpush1.xpose.msra.mxu0 0.0
    %1662 = vmatprep.mubr.f32.mxu0 0.0
    %1663 = vmatmul.mubr.f32.gmra.mrb[0].mxu0 %v694
    %v1664 = vpop.f32.mrb[0].mxu0
    %v1665 = vadd.f32 0.0, %v1664
    %v1666 = vpop.f32.mrb[0].mxu0
    %1667 = vdwg.mxu0
    %v1668 = vsel %vm768, %v1665, -inf
    %1669 = vmax.xlane.f32.xlu0 %v1668
    %v1670 = vpop.xlane.xlu0 %1669
    %v1671 = vmax.f32 %v600, %v1670
    %v1672 = vsub.f32 %v600, %v1671
    %v1673 = vmul.f32 %v1672, 1.442695
    %v1674 = vpow.pop %v1673
    %v1675 = vsub.f32 %v1665, %v1671
    %v1676 = vmul.f32 %v1675, 1.442695
    %v1677 = vpow.pop %v1676
    %v1678 = vmul.f32 %v1674, %v609
    %v1679 = vsel %vm768, %v1677, 0.0
    %1680 = vadd.xlane.f32.xlu0 %v1679
    %v1681 = vpop.xlane.xlu0 %1680
    %v1682 = vadd.f32 %v1678, %v1681
    %v1683 = vmul.f32 %v1674, %v689
    %1684 = vrot.lane.b32.xlu0 %v1517, 64
    %v1685 = vpop.permute.xlu0 %1684
    %v1687 = vsel %vm787, %v1677, 0
    %v1689 = vsel %vm791, %v1685, 0
    %1691 = vmatprep.subr.mxu0 0.0
    %1692 = vmatpush1.msra.mxu0 %v1689
    %1693 = vmatprep.subr.mxu0 0.0
    %1694 = vmatpush1.msra.mxu0 0.0
    %1695 = vmatprep.subr.mxu0 0.0
    %1696 = vmatpush1.msra.mxu0 0.0
    %1697 = vmatprep.subr.mxu0 0.0
    %1698 = vmatpush1.msra.mxu0 0.0
    %1699 = vmatprep.subr.mxu0 0.0
    %1700 = vmatpush1.msra.mxu0 0.0
    %1701 = vmatprep.subr.mxu0 0.0
    %1702 = vmatpush1.msra.mxu0 0.0
    %1703 = vmatprep.subr.mxu0 0.0
    %1704 = vmatpush1.msra.mxu0 0.0
    %1705 = vmatprep.subr.mxu0 0.0
    %1706 = vmatpush1.msra.mxu0 0.0
    %1707 = vmatprep.subr.mxu0 0.0
    %1708 = vmatpush1.msra.mxu0 0.0
    %1709 = vmatprep.subr.mxu0 0.0
    %1710 = vmatpush1.msra.mxu0 0.0
    %1711 = vmatprep.subr.mxu0 0.0
    %1712 = vmatpush1.msra.mxu0 0.0
    %1713 = vmatprep.subr.mxu0 0.0
    %1714 = vmatpush1.msra.mxu0 0.0
    %1715 = vmatprep.subr.mxu0 0.0
    %1716 = vmatpush1.msra.mxu0 0.0
    %1717 = vmatprep.subr.mxu0 0.0
    %1718 = vmatpush1.msra.mxu0 0.0
    %1719 = vmatprep.subr.mxu0 0.0
    %1720 = vmatpush1.msra.mxu0 0.0
    %1721 = vmatprep.subr.mxu0 0.0
    %1722 = vmatpush1.msra.mxu0 0.0
    %1723 = vmatprep.subr.mxu0 0.0
    %1724 = vmatpush1.msra.mxu0 0.0
    %1725 = vmatprep.subr.mxu0 0.0
    %1726 = vmatpush1.msra.mxu0 0.0
    %1727 = vmatprep.subr.mxu0 0.0
    %1728 = vmatpush1.msra.mxu0 0.0
    %1729 = vmatprep.subr.mxu0 0.0
    %1730 = vmatpush1.msra.mxu0 0.0
    %1731 = vmatprep.subr.mxu0 0.0
    %1732 = vmatpush1.msra.mxu0 0.0
    %1733 = vmatprep.subr.mxu0 0.0
    %1734 = vmatpush1.msra.mxu0 0.0
    %1735 = vmatprep.subr.mxu0 0.0
    %1736 = vmatpush1.msra.mxu0 0.0
    %1737 = vmatprep.subr.mxu0 0.0
    %1738 = vmatpush1.msra.mxu0 0.0
    %1739 = vmatprep.subr.mxu0 0.0
    %1740 = vmatpush1.msra.mxu0 0.0
    %1741 = vmatprep.subr.mxu0 0.0
    %1742 = vmatpush1.msra.mxu0 0.0
    %1743 = vmatprep.subr.mxu0 0.0
    %1744 = vmatpush1.msra.mxu0 0.0
    %1745 = vmatprep.subr.mxu0 0.0
    %1746 = vmatpush1.msra.mxu0 0.0
    %1747 = vmatprep.subr.mxu0 0.0
    %1748 = vmatpush1.msra.mxu0 0.0
    %1749 = vmatprep.subr.mxu0 0.0
    %1750 = vmatpush1.msra.mxu0 0.0
    %1751 = vmatprep.subr.mxu0 0.0
    %1752 = vmatpush1.msra.mxu0 0.0
    %1753 = vmatprep.subr.mxu0 0.0
    %1754 = vmatpush1.msra.mxu0 0.0
    %1755 = vmatprep.mubr.f32.mxu0 0.0
    %1756 = vmatmul.mubr.f32.gmra.mrb[0].mxu0 %v1687
    %v1757 = vpop.f32.mrb[0].mxu0
    %v1758 = vadd.f32 0.0, %v1757
    %v1759 = vpop.f32.mrb[0].mxu0
    %1760 = vdwg.mxu0
    %v1761 = vadd.f32 %v1683, %v1758
    %1763 = vrot.lane.b32.xlu0 %v1590, 96
    %v1764 = vpop.permute.xlu0 %1763
    %v1766 = vrot.slane %v118, 1
    %v1768 = vsel %vm120, %v1764, 0
    %1770 = vmatprep.subr.mxu0 0.0
    %1771 = vmatpush1.xpose.msra.mxu0 %v1768
    %1772 = vmatprep.subr.mxu0 0.0
    %1773 = vmatpush1.xpose.msra.mxu0 0.0
    %1774 = vmatprep.subr.mxu0 0.0
    %1775 = vmatpush1.xpose.msra.mxu0 0.0
    %1776 = vmatprep.subr.mxu0 0.0
    %1777 = vmatpush1.xpose.msra.mxu0 0.0
    %1778 = vmatprep.subr.mxu0 0.0
    %1779 = vmatpush1.xpose.msra.mxu0 0.0
    %1780 = vmatprep.subr.mxu0 0.0
    %1781 = vmatpush1.xpose.msra.mxu0 0.0
    %1782 = vmatprep.subr.mxu0 0.0
    %1783 = vmatpush1.xpose.msra.mxu0 0.0
    %1784 = vmatprep.subr.mxu0 0.0
    %1785 = vmatpush1.xpose.msra.mxu0 0.0
    %1786 = vmatprep.subr.mxu0 0.0
    %1787 = vmatpush1.xpose.msra.mxu0 0.0
    %1788 = vmatprep.subr.mxu0 0.0
    %1789 = vmatpush1.xpose.msra.mxu0 0.0
    %1790 = vmatprep.subr.mxu0 0.0
    %1791 = vmatpush1.xpose.msra.mxu0 0.0
    %1792 = vmatprep.subr.mxu0 0.0
    %1793 = vmatpush1.xpose.msra.mxu0 0.0
    %1794 = vmatprep.subr.mxu0 0.0
    %1795 = vmatpush1.xpose.msra.mxu0 0.0
    %1796 = vmatprep.subr.mxu0 0.0
    %1797 = vmatpush1.xpose.msra.mxu0 0.0
    %1798 = vmatprep.subr.mxu0 0.0
    %1799 = vmatpush1.xpose.msra.mxu0 0.0
    %1800 = vmatprep.subr.mxu0 0.0
    %1801 = vmatpush1.xpose.msra.mxu0 0.0
    %1802 = vmatprep.subr.mxu0 0.0
    %1803 = vmatpush1.xpose.msra.mxu0 0.0
    %1804 = vmatprep.subr.mxu0 0.0
    %1805 = vmatpush1.xpose.msra.mxu0 0.0
    %1806 = vmatprep.subr.mxu0 0.0
    %1807 = vmatpush1.xpose.msra.mxu0 0.0
    %1808 = vmatprep.subr.mxu0 0.0
    %1809 = vmatpush1.xpose.msra.mxu0 0.0
    %1810 = vmatprep.subr.mxu0 0.0
    %1811 = vmatpush1.xpose.msra.mxu0 0.0
    %1812 = vmatprep.subr.mxu0 0.0
    %1813 = vmatpush1.xpose.msra.mxu0 0.0
    %1814 = vmatprep.subr.mxu0 0.0
    %1815 = vmatpush1.xpose.msra.mxu0 0.0
    %1816 = vmatprep.subr.mxu0 0.0
    %1817 = vmatpush1.xpose.msra.mxu0 0.0
    %1818 = vmatprep.subr.mxu0 0.0
    %1819 = vmatpush1.xpose.msra.mxu0 0.0
    %1820 = vmatprep.subr.mxu0 0.0
    %1821 = vmatpush1.xpose.msra.mxu0 0.0
    %1822 = vmatprep.subr.mxu0 0.0
    %1823 = vmatpush1.xpose.msra.mxu0 0.0
    %1824 = vmatprep.subr.mxu0 0.0
    %1825 = vmatpush1.xpose.msra.mxu0 0.0
    %1826 = vmatprep.subr.mxu0 0.0
    %1827 = vmatpush1.xpose.msra.mxu0 0.0
    %1828 = vmatprep.subr.mxu0 0.0
    %1829 = vmatpush1.xpose.msra.mxu0 0.0
    %1830 = vmatprep.subr.mxu0 0.0
    %1831 = vmatpush1.xpose.msra.mxu0 0.0
    %1832 = vmatprep.subr.mxu0 0.0
    %1833 = vmatpush1.xpose.msra.mxu0 0.0
    %1834 = vmatprep.mubr.f32.mxu0 0.0
    %1835 = vmatmul.mubr.f32.gmra.mrb[0].mxu0 %v694
    %v1836 = vpop.f32.mrb[0].mxu0
    %v1837 = vadd.f32 %v1766, %v1836
    %v1838 = vpop.f32.mrb[0].mxu0
    %1839 = vdwg.mxu0
    %v1840 = vsel %vm940, %v1837, -inf
    %1841 = vmax.xlane.f32.xlu0 %v1840
    %v1842 = vpop.xlane.xlu0 %1841
    %v1843 = vmax.f32 %v1671, %v1842
    %v1844 = vsub.f32 %v1671, %v1843
    %v1845 = vmul.f32 %v1844, 1.442695
    %v1846 = vpow.pop %v1845
    %v1847 = vsub.f32 %v1837, %v1843
    %v1848 = vmul.f32 %v1847, 1.442695
    %v1849 = vpow.pop %v1848
    %v1850 = vmul.f32 %v1846, %v1682
    %v1851 = vsel %vm940, %v1849, 0.0
    %1852 = vadd.xlane.f32.xlu0 %v1851
    %v1853 = vpop.xlane.xlu0 %1852
    %v1854 = vadd.f32 %v1850, %v1853
    %v1855 = vmul.f32 %v1846, %v1761
    %1856 = vrot.lane.b32.xlu0 %v1590, 64
    %v1857 = vpop.permute.xlu0 %1856
    %v1860 = vsel %vm960, %v1849, 0
    %1862 = vmatprep.subr.mxu0 0.0
    %1863 = vmatpush1.msra.mxu0 %v1857
    %1864 = vmatprep.subr.mxu0 0.0
    %1865 = vmatpush1.msra.mxu0 0.0
    %1866 = vmatprep.subr.mxu0 0.0
    %1867 = vmatpush1.msra.mxu0 0.0
    %1868 = vmatprep.subr.mxu0 0.0
    %1869 = vmatpush1.msra.mxu0 0.0
    %1870 = vmatprep.subr.mxu0 0.0
    %1871 = vmatpush1.msra.mxu0 0.0
    %1872 = vmatprep.subr.mxu0 0.0
    %1873 = vmatpush1.msra.mxu0 0.0
    %1874 = vmatprep.subr.mxu0 0.0
    %1875 = vmatpush1.msra.mxu0 0.0
    %1876 = vmatprep.subr.mxu0 0.0
    %1877 = vmatpush1.msra.mxu0 0.0
    %1878 = vmatprep.subr.mxu0 0.0
    %1879 = vmatpush1.msra.mxu0 0.0
    %1880 = vmatprep.subr.mxu0 0.0
    %1881 = vmatpush1.msra.mxu0 0.0
    %1882 = vmatprep.subr.mxu0 0.0
    %1883 = vmatpush1.msra.mxu0 0.0
    %1884 = vmatprep.subr.mxu0 0.0
    %1885 = vmatpush1.msra.mxu0 0.0
    %1886 = vmatprep.subr.mxu0 0.0
    %1887 = vmatpush1.msra.mxu0 0.0
    %1888 = vmatprep.subr.mxu0 0.0
    %1889 = vmatpush1.msra.mxu0 0.0
    %1890 = vmatprep.subr.mxu0 0.0
    %1891 = vmatpush1.msra.mxu0 0.0
    %1892 = vmatprep.subr.mxu0 0.0
    %1893 = vmatpush1.msra.mxu0 0.0
    %1894 = vmatprep.subr.mxu0 0.0
    %1895 = vmatpush1.msra.mxu0 0.0
    %1896 = vmatprep.subr.mxu0 0.0
    %1897 = vmatpush1.msra.mxu0 0.0
    %1898 = vmatprep.subr.mxu0 0.0
    %1899 = vmatpush1.msra.mxu0 0.0
    %1900 = vmatprep.subr.mxu0 0.0
    %1901 = vmatpush1.msra.mxu0 0.0
    %1902 = vmatprep.subr.mxu0 0.0
    %1903 = vmatpush1.msra.mxu0 0.0
    %1904 = vmatprep.subr.mxu0 0.0
    %1905 = vmatpush1.msra.mxu0 0.0
    %1906 = vmatprep.subr.mxu0 0.0
    %1907 = vmatpush1.msra.mxu0 0.0
    %1908 = vmatprep.subr.mxu0 0.0
    %1909 = vmatpush1.msra.mxu0 0.0
    %1910 = vmatprep.subr.mxu0 0.0
    %1911 = vmatpush1.msra.mxu0 0.0
    %1912 = vmatprep.subr.mxu0 0.0
    %1913 = vmatpush1.msra.mxu0 0.0
    %1914 = vmatprep.subr.mxu0 0.0
    %1915 = vmatpush1.msra.mxu0 0.0
    %1916 = vmatprep.subr.mxu0 0.0
    %1917 = vmatpush1.msra.mxu0 0.0
    %1918 = vmatprep.subr.mxu0 0.0
    %1919 = vmatpush1.msra.mxu0 0.0
    %1920 = vmatprep.subr.mxu0 0.0
    %1921 = vmatpush1.msra.mxu0 0.0
    %1922 = vmatprep.subr.mxu0 0.0
    %1923 = vmatpush1.msra.mxu0 0.0
    %1924 = vmatprep.subr.mxu0 0.0
    %1925 = vmatpush1.msra.mxu0 0.0
    %1926 = vmatprep.mubr.f32.mxu0 0.0
    %1927 = vmatmul.mubr.f32.gmra.mrb[0].mxu0 %v1860
    %v1928 = vpop.f32.mrb[0].mxu0
    %v1929 = vadd.f32 0.0, %v1928
    %v1930 = vpop.f32.mrb[0].mxu0
    %1931 = vdwg.mxu0
    %v1932 = vadd.f32 %v1855, %v1929
    %v1933 = vrcp.pop %v1854
    %v1934 = vmul.f32 %v1932, %v1933
    %v1936 = vsel %vm120, %v1934, 0
    %1938 = vmatprep.subr.mxu0 0.0
    %1939 = vmatpush1.msra.mxu0 %v108
    %1940 = vmatprep.subr.mxu0 0.0
    %1941 = vmatpush1.msra.mxu0 %v109
    %1942 = vmatprep.subr.mxu0 0.0
    %1943 = vmatpush1.msra.mxu0 %v110
    %1944 = vmatprep.subr.mxu0 0.0
    %1945 = vmatpush1.msra.mxu0 %v111
    %1946 = vmatprep.subr.mxu0 0.0
    %1947 = vmatpush1.msra.mxu0 0.0
    %1948 = vmatprep.subr.mxu0 0.0
    %1949 = vmatpush1.msra.mxu0 0.0
    %1950 = vmatprep.subr.mxu0 0.0
    %1951 = vmatpush1.msra.mxu0 0.0
    %1952 = vmatprep.subr.mxu0 0.0
    %1953 = vmatpush1.msra.mxu0 0.0
    %1954 = vmatprep.subr.mxu0 0.0
    %1955 = vmatpush1.msra.mxu0 0.0
    %1956 = vmatprep.subr.mxu0 0.0
    %1957 = vmatpush1.msra.mxu0 0.0
    %1958 = vmatprep.subr.mxu0 0.0
    %1959 = vmatpush1.msra.mxu0 0.0
    %1960 = vmatprep.subr.mxu0 0.0
    %1961 = vmatpush1.msra.mxu0 0.0
    %1962 = vmatprep.subr.mxu0 0.0
    %1963 = vmatpush1.msra.mxu0 0.0
    %1964 = vmatprep.subr.mxu0 0.0
    %1965 = vmatpush1.msra.mxu0 0.0
    %1966 = vmatprep.subr.mxu0 0.0
    %1967 = vmatpush1.msra.mxu0 0.0
    %1968 = vmatprep.subr.mxu0 0.0
    %1969 = vmatpush1.msra.mxu0 0.0
    %1970 = vmatprep.subr.mxu0 0.0
    %1971 = vmatpush1.msra.mxu0 0.0
    %1972 = vmatprep.subr.mxu0 0.0
    %1973 = vmatpush1.msra.mxu0 0.0
    %1974 = vmatprep.subr.mxu0 0.0
    %1975 = vmatpush1.msra.mxu0 0.0
    %1976 = vmatprep.subr.mxu0 0.0
    %1977 = vmatpush1.msra.mxu0 0.0
    %1978 = vmatprep.subr.mxu0 0.0
    %1979 = vmatpush1.msra.mxu0 0.0
    %1980 = vmatprep.subr.mxu0 0.0
    %1981 = vmatpush1.msra.mxu0 0.0
    %1982 = vmatprep.subr.mxu0 0.0
    %1983 = vmatpush1.msra.mxu0 0.0
    %1984 = vmatprep.subr.mxu0 0.0
    %1985 = vmatpush1.msra.mxu0 0.0
    %1986 = vmatprep.subr.mxu0 0.0
    %1987 = vmatpush1.msra.mxu0 0.0
    %1988 = vmatprep.subr.mxu0 0.0
    %1989 = vmatpush1.msra.mxu0 0.0
    %1990 = vmatprep.subr.mxu0 0.0
    %1991 = vmatpush1.msra.mxu0 0.0
    %1992 = vmatprep.subr.mxu0 0.0
    %1993 = vmatpush1.msra.mxu0 0.0
    %1994 = vmatprep.subr.mxu0 0.0
    %1995 = vmatpush1.msra.mxu0 0.0
    %1996 = vmatprep.subr.mxu0 0.0
    %1997 = vmatpush1.msra.mxu0 0.0
    %1998 = vmatprep.subr.mxu0 0.0
    %1999 = vmatpush1.msra.mxu0 0.0
    %2000 = vmatprep.subr.mxu0 0.0
    %2001 = vmatpush1.msra.mxu0 0.0
    %2002 = vmatprep.mubr.f32.mxu0 0.0
    %2003 = vmatmul.mubr.f32.gmra.mrb[0].mxu0 %v1936
    %v2004 = vpop.f32.mrb[0].mxu0
    %v2005 = vadd.f32 0.0, %v2004
    %v2006 = vpop.f32.mrb[0].mxu0
    %2007 = vdwg.mxu0
    %v2008 = vadd.f32 %v102, %v2005
    %v2009 = vadd.f32 %v2008, %v112
    %v2011 = vsel %vm120, %v2009, 0
    %2013 = vmatprep.subr.mxu0 0.0
    %2014 = vmatpush1.msra.mxu0 %v113
    %2015 = vmatprep.subr.mxu0 0.0
    %2016 = vmatpush1.msra.mxu0 %v114
    %2017 = vmatprep.subr.mxu0 0.0
    %2018 = vmatpush1.msra.mxu0 %v115
    %2019 = vmatprep.subr.mxu0 0.0
    %2020 = vmatpush1.msra.mxu0 %v116
    %2021 = vmatprep.subr.mxu0 0.0
    %2022 = vmatpush1.msra.mxu0 0.0
    %2023 = vmatprep.subr.mxu0 0.0
    %2024 = vmatpush1.msra.mxu0 0.0
    %2025 = vmatprep.subr.mxu0 0.0
    %2026 = vmatpush1.msra.mxu0 0.0
    %2027 = vmatprep.subr.mxu0 0.0
    %2028 = vmatpush1.msra.mxu0 0.0
    %2029 = vmatprep.subr.mxu0 0.0
    %2030 = vmatpush1.msra.mxu0 0.0
    %2031 = vmatprep.subr.mxu0 0.0
    %2032 = vmatpush1.msra.mxu0 0.0
    %2033 = vmatprep.subr.mxu0 0.0
    %2034 = vmatpush1.msra.mxu0 0.0
    %2035 = vmatprep.subr.mxu0 0.0
    %2036 = vmatpush1.msra.mxu0 0.0
    %2037 = vmatprep.subr.mxu0 0.0
    %2038 = vmatpush1.msra.mxu0 0.0
    %2039 = vmatprep.subr.mxu0 0.0
    %2040 = vmatpush1.msra.mxu0 0.0
    %2041 = vmatprep.subr.mxu0 0.0
    %2042 = vmatpush1.msra.mxu0 0.0
    %2043 = vmatprep.subr.mxu0 0.0
    %2044 = vmatpush1.msra.mxu0 0.0
    %2045 = vmatprep.subr.mxu0 0.0
    %2046 = vmatpush1.msra.mxu0 0.0
    %2047 = vmatprep.subr.mxu0 0.0
    %2048 = vmatpush1.msra.mxu0 0.0
    %2049 = vmatprep.subr.mxu0 0.0
    %2050 = vmatpush1.msra.mxu0 0.0
    %2051 = vmatprep.subr.mxu0 0.0
    %2052 = vmatpush1.msra.mxu0 0.0
    %2053 = vmatprep.subr.mxu0 0.0
    %2054 = vmatpush1.msra.mxu0 0.0
    %2055 = vmatprep.subr.mxu0 0.0
    %2056 = vmatpush1.msra.mxu0 0.0
    %2057 = vmatprep.subr.mxu0 0.0
    %2058 = vmatpush1.msra.mxu0 0.0
    %2059 = vmatprep.subr.mxu0 0.0
    %2060 = vmatpush1.msra.mxu0 0.0
    %2061 = vmatprep.subr.mxu0 0.0
    %2062 = vmatpush1.msra.mxu0 0.0
    %2063 = vmatprep.subr.mxu0 0.0
    %2064 = vmatpush1.msra.mxu0 0.0
    %2065 = vmatprep.subr.mxu0 0.0
    %2066 = vmatpush1.msra.mxu0 0.0
    %2067 = vmatprep.subr.mxu0 0.0
    %2068 = vmatpush1.msra.mxu0 0.0
    %2069 = vmatprep.subr.mxu0 0.0
    %2070 = vmatpush1.msra.mxu0 0.0
    %2071 = vmatprep.subr.mxu0 0.0
    %2072 = vmatpush1.msra.mxu0 0.0
    %2073 = vmatprep.subr.mxu0 0.0
    %2074 = vmatpush1.msra.mxu0 0.0
    %2075 = vmatprep.subr.mxu0 0.0
    %2076 = vmatpush1.msra.mxu0 0.0
    %2077 = vmatprep.mubr.f32.mxu0 0.0
    %2078 = vmatmul.mubr.f32.gmra.mrb[0].mxu0 %v2011
    %v2079 = vpop.f32.mrb[0].mxu0
    %v2080 = vadd.f32 %v117, %v2079
    %v2081 = vpop.f32.mrb[0].mxu0
    %2082 = vdwg.mxu0
    %v2083 = vsel %vm616, %v2080, -inf
    %2084 = vmax.xlane.f32.xlu0 %v2083
    %v2085 = vpop.xlane.xlu0 %2084
    %v2086 = vsub.f32 %v2080, %v2085
    %v2087 = vmul.f32 %v2086, 1.442695
    %v2088 = vpow.pop %v2087
    %v2089 = vsel %vm616, %v2088, 0.0
    %2090 = vadd.xlane.f32.xlu0 %v2089
    %v2091 = vpop.xlane.xlu0 %2090
    %v2092 = vlog2.pop %v2091
    %v2093 = vmul.f32 %v2092, 0.6931472
    %v2094 = vadd.f32 %v2085, %v2093
    %v2096 = vrot.slane %v1202, 1
    %v2098 = vmul.f32 %v2080, %v2096
    %v2099 = vsel %vm616, %v2098, 0.0
    %2100 = vadd.xlane.f32.xlu0 %v2099
    %v2101 = vpop.xlane.xlu0 %2100
    %v2102 = vsub.f32 %v2094, %v2101
    %v2104 = vrot.slane %v1209, 1
    %v2106 = vmul.f32 %v2102, %v2104
    %v2107 = vadd.f32 %v1212, %v2106
    %v2108 = vadd.f32 %v1213, %v2104
    %vm2109 = vcmp.ge.f32.partialorder %v2080, %v2085
    %v2110 = vsel %vm2109, %v197, 128.0
    %v2111 = vsel %vm616, %v2110, inf
    %2112 = vmin.xlane.f32.xlu0 %v2111
    %v2113 = vpop.xlane.xlu0 %2112
    %v2114 = vcvt.f32.s32.to.zero.pseudo %v2113
    %vm2115 = vcmp.eq.s32.totalorder %v196, 1
    %v2116 = vsel %vm2115, 1, 0
    %v2117 = vmul.u32 %v2114, %v2116
    %v2118 = vadd.s32 %v1222, %v2117
    %vm2119 = vcmask 0
    %2120 = vst.msk [vmem:[#allocation2] sm:$0x1] %vm2119, %v2107
    %2121 = vst.msk [vmem:[#allocation4] sm:$0x1] %vm2119, %v2108
    %vm2122 = vcmask 8192
    %2123 = vst.msk [vmem:[#allocation6] sm:$0x1] %vm2122, %v2118
    // Predicated region
    $region70: #{forward.1} parent=1 // pred_check
      _
    $region71: #{forward.1} parent=1 // pred_check_branch
      %2125 = sbr.rel (0) target = $region73
    $region72: #{forward.1} parent=1 // pred_region
      %s2127 = ssub.s32 16, 16
      %2128 = vsyncadd [#allocation3], %s2127
      %s2130 = sshll.u32 [#allocation2], 4
      %s2131 = int_to_ptr.vmem [resolvable:$true] %s2130
      %2133 = dma.vmem_to_hbm [thread:$0]  %s2131, 16, %s17, [#allocation3]
    $region73: #{forward.1} parent=1 // pred_fallthru
      _
    // Predicated region
    $region74: #{forward.1} parent=1 // pred_check
      _
    $region75: #{forward.1} parent=1 // pred_check_branch
      %2135 = sbr.rel (0) target = $region77
    $region76: #{forward.1} parent=1 // pred_region
      %s2137 = ssub.s32 16, 16
      %2138 = vsyncadd [#allocation5], %s2137
      %s2140 = sshll.u32 [#allocation4], 4
      %s2141 = int_to_ptr.vmem [resolvable:$true] %s2140
      %2143 = dma.vmem_to_hbm [thread:$0]  %s2141, 16, %s18, [#allocation5]
    $region77: #{forward.1} parent=1 // pred_fallthru
      _
    // Predicated region
    $region78: #{forward.1} parent=1 // pred_check
      _
    $region79: #{forward.1} parent=1 // pred_check_branch
      %2145 = sbr.rel (0) target = $region81
    $region80: #{forward.1} parent=1 // pred_region
      %s2147 = ssub.s32 16, 16
      %2148 = vsyncadd [#allocation5], %s2147
      %s2150 = sshll.u32 [#allocation6], 4
      %s2151 = int_to_ptr.vmem [resolvable:$true] %s2150
      %2153 = dma.vmem_to_hbm [thread:$0]  %s2151, 16, %s19, [#allocation5]
    $region81: #{forward.1} parent=1 // pred_fallthru
      _
    // Predicated region
    $region82: #{forward.1} parent=1 // pred_check
      _
    $region83: #{forward.1} parent=1 // pred_check_branch
      %2155 = sbr.rel (0) target = $region85
    $region84: #{forward.1} parent=1 // pred_region
      %2156 = dma.done [#allocation3], 16
    $region85: #{forward.1} parent=1 // pred_fallthru
      _
    // Predicated region
    $region86: #{forward.1} parent=1 // pred_check
      _
    $region87: #{forward.1} parent=1 // pred_check_branch
      %2158 = sbr.rel (0) target = $region89
    $region88: #{forward.1} parent=1 // pred_region
      %2159 = dma.done [#allocation5], 16
    $region89: #{forward.1} parent=1 // pred_fallthru
      _
    // Predicated region
    $region90: #{forward.1} parent=1 // pred_check
      _
    $region91: #{forward.1} parent=1 // pred_check_branch
      %2161 = sbr.rel (0) target = $region93
    $region92: #{forward.1} parent=1 // pred_region
      %2162 = dma.done [#allocation5], 16
    $region93: #{forward.1} parent=1 // pred_fallthru
      _
    %2163 = vsyncpa [#allocation3], 1
    %2164 = vsyncpa [#allocation5], 1

</llo_original>
